<compile_context>
chip_gen: v5e
topology: v5e:2x2
jax: 0.10.0
libtpu: 0.0.40
codegen_flags: <defaults>
</compile_context>

<pallas_src>
import functools

import jax
import jax.numpy as jnp
from jax.experimental import pallas as pl
from jax.experimental.pallas import tpu as pltpu


def _vicreg_kernel(z1_ref, z2_ref, out_ref,
                   sum1_ref, sumsq1_ref, gram1_ref,
                   sum2_ref, sumsq2_ref, gram2_ref,
                   sse_ref,
                   *, n_total, sim_w, var_w, cov_w, normalize):
    i = pl.program_id(0)
    d = gram1_ref.shape[0]  # static

    # ---- init accumulators on the first batch tile ----
    @pl.when(i == 0)
    def _init():
        sum1_ref[...] = jnp.zeros_like(sum1_ref)
        sumsq1_ref[...] = jnp.zeros_like(sumsq1_ref)
        gram1_ref[...] = jnp.zeros_like(gram1_ref)
        sum2_ref[...] = jnp.zeros_like(sum2_ref)
        sumsq2_ref[...] = jnp.zeros_like(sumsq2_ref)
        gram2_ref[...] = jnp.zeros_like(gram2_ref)
        sse_ref[...] = jnp.zeros_like(sse_ref)

    z1 = z1_ref[...]  # (TN, D), input dtype (bf16 stays bf16 for the MXU)
    z2 = z2_ref[...]

    if normalize:  # static flag (module's `normalize` option)
        def _l2norm(z):
            zf = z.astype(jnp.float32)
            nrm = jnp.sqrt(jnp.sum(zf * zf, axis=-1, keepdims=True))
            return (zf / jnp.maximum(nrm, 1e-12)).astype(z.dtype)
        z1 = _l2norm(z1)
        z2 = _l2norm(z2)

    z1f = z1.astype(jnp.float32)
    z2f = z2.astype(jnp.float32)

    # ---- invariance (sim) term partial: sum of squared differences ----
    diff = z1f - z2f
    sse_ref[...] += jnp.sum(diff * diff, keepdims=True)           # (1, 1)

    # ---- sufficient statistics for variance / covariance ----
    sum1_ref[...] += jnp.sum(z1f, axis=0, keepdims=True)          # (1, D)
    sum2_ref[...] += jnp.sum(z2f, axis=0, keepdims=True)
    sumsq1_ref[...] += jnp.sum(z1f * z1f, axis=0, keepdims=True)  # (1, D)
    sumsq2_ref[...] += jnp.sum(z2f * z2f, axis=0, keepdims=True)

    # Raw Gram z^T z on the MXU (contract the batch axis), f32 accumulation.
    dn = (((0,), (0,)), ((), ()))
    gram1_ref[...] += jax.lax.dot_general(z1, z1, dn,
                                          preferred_element_type=jnp.float32)
    gram2_ref[...] += jax.lax.dot_general(z2, z2, dn,
                                          preferred_element_type=jnp.float32)

    # ---- finalize on the last batch tile ----
    @pl.when(i == pl.num_programs(0) - 1)
    def _finalize():
        n = float(n_total)
        inv_n = 1.0 / n
        inv_nm1 = 1.0 / (n - 1.0)
        inv_d = 1.0 / d

        def _terms(s_ref, ss_ref, g_ref):
            s = s_ref[...]                                  # (1, D)
            ss = ss_ref[...]                                # (1, D)
            g = g_ref[...]                                  # (D, D)
            mean = s * inv_n                                # (1, D)
            # unbiased variance WITHOUT eps == diag(cov)
            var = (ss - n * mean * mean) * inv_nm1          # (1, D)
            std = jnp.sqrt(var + 1e-4)
            var_term = jnp.sum(jnp.maximum(1.0 - std, 0.0), keepdims=True) * inv_d
            # centered Gram: cg = G - n * outer(mean, mean); cov = cg / (n-1)
            outer = jnp.transpose(jnp.broadcast_to(mean, (d, d))) * mean  # m_i*m_j
            cg = g - n * outer
            cov_sq_sum = jnp.sum(cg * cg, keepdims=True) * (inv_nm1 * inv_nm1)
            diag_sq_sum = jnp.sum(var * var, keepdims=True)
            cov_term = (cov_sq_sum - diag_sq_sum) * inv_d   # off-diagonal only
            return var_term, cov_term

        v1, c1 = _terms(sum1_ref, sumsq1_ref, gram1_ref)
        v2, c2 = _terms(sum2_ref, sumsq2_ref, gram2_ref)
        sim = sse_ref[...] * (inv_n * inv_d)                # mean squared error

        loss = sim_w * sim + var_w * (v1 + v2) + cov_w * (c1 + c2)
        out_ref[...] = loss.astype(jnp.float32)


def _pick_block_rows(n, d, itemsize):
    """Largest batch-tile that divides N, keeps sublane alignment, fits a budget."""
    sub = {4: 8, 2: 16, 1: 32}.get(itemsize, 8)
    if n % sub != 0:
        return n  # single full block (block_shape == array shape is always legal)
    budget = 8 * 1024 * 1024  # bytes for the 2 inputs x 2 pipeline buffers
    cap = budget // (4 * d * itemsize)
    cap = max(sub, min(1024, (cap // sub) * sub))
    tn = min(n, cap)
    tn = max(sub, (tn // sub) * sub)
    while tn > sub and n % tn != 0:
        tn -= sub
    return tn if n % tn == 0 else n


def vicreg_loss(z1, z2, sim_loss_weight=25.0, var_loss_weight=25.0,
                cov_loss_weight=1.0, normalize=False, block_rows=None):
    assert z1.shape == z2.shape and z1.ndim == 2
    N, D = z1.shape
    itemsize = jnp.dtype(z1.dtype).itemsize
    if block_rows is None:
        block_rows = _pick_block_rows(N, D, itemsize)
    tn = int(block_rows)
    assert N % tn == 0, "block_rows must divide the batch size"
    grid = (N // tn,)

    kernel = functools.partial(
        _vicreg_kernel,
        n_total=N,
        sim_w=float(sim_loss_weight),
        var_w=float(var_loss_weight),
        cov_w=float(cov_loss_weight),
        normalize=bool(normalize),
    )

    # VMEM budget: 2 resident (D,D) f32 Gram accumulators (+ finalize temps),
    # 2 inputs x 2 pipeline buffers of (tn, D), plus small per-feature vectors.
    needed = 3 * (2 * D * D * 4) + (2 * 2 * tn * D * itemsize) + (4 * D * 4) + (1 << 20)
    vmem_limit = int(min(100 * 1024 * 1024, max(needed, 32 * 1024 * 1024)))

    cost = pl.CostEstimate(
        flops=4 * N * D * D + 12 * N * D + 8 * D * D,
        transcendentals=2 * D,
        bytes_accessed=2 * N * D * itemsize + 4,
    )

    out = pl.pallas_call(
        kernel,
        out_shape=jax.ShapeDtypeStruct((1, 1), jnp.float32),
        grid_spec=pltpu.PrefetchScalarGridSpec(
            num_scalar_prefetch=0,
            grid=grid,
            in_specs=[
                pl.BlockSpec((tn, D), lambda i: (i, 0)),
                pl.BlockSpec((tn, D), lambda i: (i, 0)),
            ],
            out_specs=pl.BlockSpec((1, 1), lambda i: (0, 0)),
            scratch_shapes=[
                pltpu.VMEM((1, D), jnp.float32),   # sum(z1)
                pltpu.VMEM((1, D), jnp.float32),   # sum(z1^2)
                pltpu.VMEM((D, D), jnp.float32),   # z1^T z1
                pltpu.VMEM((1, D), jnp.float32),   # sum(z2)
                pltpu.VMEM((1, D), jnp.float32),   # sum(z2^2)
                pltpu.VMEM((D, D), jnp.float32),   # z2^T z2
                pltpu.VMEM((1, 1), jnp.float32),   # sum((z1-z2)^2)
            ],
        ),
        compiler_params=pltpu.CompilerParams(
            dimension_semantics=("arbitrary",),
            vmem_limit_bytes=vmem_limit,
        ),
        cost_estimate=cost,
    )(z1, z2)
    return out[0, 0]


def _vicreg_loss_ref(z1, z2, sim_w=25.0, var_w=25.0, cov_w=1.0):
    # Pure-JAX reference (mirrors the PyTorch module) for a sanity check.
    z1 = z1.astype(jnp.float32)
    z2 = z2.astype(jnp.float32)
    n, d = z1.shape
    sim = jnp.mean((z1 - z2) ** 2)

    def var_l(z):
        std = jnp.sqrt(jnp.var(z, axis=0, ddof=1) + 1e-4)
        return jnp.mean(jnp.maximum(1.0 - std, 0.0))

    def cov_l(z):
        zc = z - jnp.mean(z, axis=0, keepdims=True)
        cov = zc.T @ zc / (n - 1)
        off = jnp.sum(cov ** 2) - jnp.sum(jnp.diag(cov) ** 2)
        return off / d

    return (sim_w * sim + var_w * (var_l(z1) + var_l(z2))
            + cov_w * (cov_l(z1) + cov_l(z2)))


if __name__ == "__main__":
    key = jax.random.PRNGKey(0)
    k1, k2 = jax.random.split(key)
    N, D = 64, 128  # small, but exercises real (16, 128) batch tiling (grid of 4)
    z1 = jax.random.normal(k1, (N, D), dtype=jnp.float32)
    z2 = jax.random.normal(k2, (N, D), dtype=jnp.float32)

    loss = vicreg_loss(z1, z2, block_rows=16)
    jax.block_until_ready(loss)

    ref = _vicreg_loss_ref(z1, z2)
    assert jnp.allclose(loss, ref, rtol=1e-4, atol=1e-3), (loss, ref)

    print("KERNEL_OK")
</pallas_src>

<mosaic_0001>
module attributes {stable_mosaic.version = 11 : i64} {
  func.func @_vicreg_kernel(%arg0: i32, %arg1: memref<16x128xf32, #tpu.memory_space<vmem>>, %arg2: memref<16x128xf32, #tpu.memory_space<vmem>>, %arg3: memref<1x1xf32, #tpu.memory_space<vmem>>, %arg4: memref<1x128xf32, #tpu.memory_space<vmem>>, %arg5: memref<1x128xf32, #tpu.memory_space<vmem>>, %arg6: memref<128x128xf32, #tpu.memory_space<vmem>>, %arg7: memref<1x128xf32, #tpu.memory_space<vmem>>, %arg8: memref<1x128xf32, #tpu.memory_space<vmem>>, %arg9: memref<128x128xf32, #tpu.memory_space<vmem>>, %arg10: memref<1x1xf32, #tpu.memory_space<vmem>>) attributes {dimension_semantics = [#tpu.dimension_semantics<arbitrary>], iteration_bounds = array<i64: 4>, scalar_prefetch = 0 : i64, scratch_operands = 7 : i64, tpu.core_type = #tpu.core_type<tc>, window_params = [{transform_indices = @transform_0, window_bounds = array<i64: 16, 128>}, {transform_indices = @transform_1, window_bounds = array<i64: 16, 128>}, {pipeline_mode = #tpu.pipeline_mode<synchronous>, transform_indices = @transform_2, window_bounds = array<i64: 1, 1>}]} {
    %c0_i32 = arith.constant 0 : i32
    %0 = arith.cmpi eq, %arg0, %c0_i32 : i32
    %1 = arith.extui %0 : i1 to i32
    %c0_i32_0 = arith.constant 0 : i32
    %2 = arith.cmpi ne, %1, %c0_i32_0 : i32
    scf.if %2 {
      %cst_39 = arith.constant 0.000000e+00 : f32
      %48 = vector.broadcast %cst_39 : f32 to vector<1x128xf32>
      %c0_40 = arith.constant 0 : index
      %c0_41 = arith.constant 0 : index
      %49 = vector.load %arg4[%c0_40, %c0_41] : memref<1x128xf32, #tpu.memory_space<vmem>>, vector<1x128xf32>
      tpu.vector_store %arg4[%c0_40, %c0_41], %48 {strides = array<i32>} : memref<1x128xf32, #tpu.memory_space<vmem>>, vector<1x128xf32>,
      %cst_42 = arith.constant 0.000000e+00 : f32
      %50 = vector.broadcast %cst_42 : f32 to vector<1x128xf32>
      %c0_43 = arith.constant 0 : index
      %c0_44 = arith.constant 0 : index
      %51 = vector.load %arg5[%c0_43, %c0_44] : memref<1x128xf32, #tpu.memory_space<vmem>>, vector<1x128xf32>
      tpu.vector_store %arg5[%c0_43, %c0_44], %50 {strides = array<i32>} : memref<1x128xf32, #tpu.memory_space<vmem>>, vector<1x128xf32>,
      %cst_45 = arith.constant 0.000000e+00 : f32
      %52 = vector.broadcast %cst_45 : f32 to vector<128x128xf32>
      %c0_46 = arith.constant 0 : index
      %c0_47 = arith.constant 0 : index
      %53 = vector.load %arg6[%c0_46, %c0_47] : memref<128x128xf32, #tpu.memory_space<vmem>>, vector<128x128xf32>
      tpu.vector_store %arg6[%c0_46, %c0_47], %52 {strides = array<i32>} : memref<128x128xf32, #tpu.memory_space<vmem>>, vector<128x128xf32>,
      %cst_48 = arith.constant 0.000000e+00 : f32
      %54 = vector.broadcast %cst_48 : f32 to vector<1x128xf32>
      %c0_49 = arith.constant 0 : index
      %c0_50 = arith.constant 0 : index
      %55 = vector.load %arg7[%c0_49, %c0_50] : memref<1x128xf32, #tpu.memory_space<vmem>>, vector<1x128xf32>
      tpu.vector_store %arg7[%c0_49, %c0_50], %54 {strides = array<i32>} : memref<1x128xf32, #tpu.memory_space<vmem>>, vector<1x128xf32>,
      %cst_51 = arith.constant 0.000000e+00 : f32
      %56 = vector.broadcast %cst_51 : f32 to vector<1x128xf32>
      %c0_52 = arith.constant 0 : index
      %c0_53 = arith.constant 0 : index
      %57 = vector.load %arg8[%c0_52, %c0_53] : memref<1x128xf32, #tpu.memory_space<vmem>>, vector<1x128xf32>
      tpu.vector_store %arg8[%c0_52, %c0_53], %56 {strides = array<i32>} : memref<1x128xf32, #tpu.memory_space<vmem>>, vector<1x128xf32>,
      %cst_54 = arith.constant 0.000000e+00 : f32
      %58 = vector.broadcast %cst_54 : f32 to vector<128x128xf32>
      %c0_55 = arith.constant 0 : index
      %c0_56 = arith.constant 0 : index
      %59 = vector.load %arg9[%c0_55, %c0_56] : memref<128x128xf32, #tpu.memory_space<vmem>>, vector<128x128xf32>
      tpu.vector_store %arg9[%c0_55, %c0_56], %58 {strides = array<i32>} : memref<128x128xf32, #tpu.memory_space<vmem>>, vector<128x128xf32>,
      %cst_57 = arith.constant 0.000000e+00 : f32
      %60 = vector.broadcast %cst_57 : f32 to vector<1x1xf32>
      %c0_58 = arith.constant 0 : index
      %c0_59 = arith.constant 0 : index
      %61 = vector.load %arg10[%c0_58, %c0_59] : memref<1x1xf32, #tpu.memory_space<vmem>>, vector<1x1xf32>
      tpu.vector_store %arg10[%c0_58, %c0_59], %60 {strides = array<i32>} : memref<1x1xf32, #tpu.memory_space<vmem>>, vector<1x1xf32>,
    } else {
    }
    %c0 = arith.constant 0 : index
    %c0_1 = arith.constant 0 : index
    %3 = vector.load %arg1[%c0, %c0_1] : memref<16x128xf32, #tpu.memory_space<vmem>>, vector<16x128xf32>
    %c0_2 = arith.constant 0 : index
    %c0_3 = arith.constant 0 : index
    %4 = vector.load %arg2[%c0_2, %c0_3] : memref<16x128xf32, #tpu.memory_space<vmem>>, vector<16x128xf32>
    %5 = arith.subf %3, %4 : vector<16x128xf32>
    %c0_4 = arith.constant 0 : index
    %c0_5 = arith.constant 0 : index
    %6 = vector.load %arg10[%c0_4, %c0_5] : memref<1x1xf32, #tpu.memory_space<vmem>>, vector<1x1xf32>
    %7 = arith.mulf %5, %5 : vector<16x128xf32>
    %8 = vector.shape_cast %7 : vector<16x128xf32> to vector<1x16x128xf32>
    %cst = arith.constant dense<0.000000e+00> : vector<1xf32>
    %9 = vector.multi_reduction <add>, %8, %cst [1, 2] : vector<1x16x128xf32> to vector<1xf32>
    %10 = vector.shape_cast %9 : vector<1xf32> to vector<1x1x1xf32>
    %11 = vector.extract %10[0, 0, 0] : f32 from vector<1x1x1xf32>
    %12 = vector.broadcast %11 : f32 to vector<1x1xf32>
    %13 = arith.addf %6, %12 : vector<1x1xf32>
    %c0_6 = arith.constant 0 : index
    %c0_7 = arith.constant 0 : index
    %14 = vector.load %arg10[%c0_6, %c0_7] : memref<1x1xf32, #tpu.memory_space<vmem>>, vector<1x1xf32>
    tpu.vector_store %arg10[%c0_6, %c0_7], %13 {strides = array<i32>} : memref<1x1xf32, #tpu.memory_space<vmem>>, vector<1x1xf32>,
    %c0_8 = arith.constant 0 : index
    %c0_9 = arith.constant 0 : index
    %15 = vector.load %arg4[%c0_8, %c0_9] : memref<1x128xf32, #tpu.memory_space<vmem>>, vector<1x128xf32>
    %cst_10 = arith.constant dense<0.000000e+00> : vector<128xf32>
    %16 = vector.multi_reduction <add>, %3, %cst_10 [0] : vector<16x128xf32> to vector<128xf32>
    %17 = vector.shape_cast %16 : vector<128xf32> to vector<1x128xf32>
    %18 = arith.addf %15, %17 : vector<1x128xf32>
    %c0_11 = arith.constant 0 : index
    %c0_12 = arith.constant 0 : index
    %19 = vector.load %arg4[%c0_11, %c0_12] : memref<1x128xf32, #tpu.memory_space<vmem>>, vector<1x128xf32>
    tpu.vector_store %arg4[%c0_11, %c0_12], %18 {strides = array<i32>} : memref<1x128xf32, #tpu.memory_space<vmem>>, vector<1x128xf32>,
    %c0_13 = arith.constant 0 : index
    %c0_14 = arith.constant 0 : index
    %20 = vector.load %arg7[%c0_13, %c0_14] : memref<1x128xf32, #tpu.memory_space<vmem>>, vector<1x128xf32>
    %cst_15 = arith.constant dense<0.000000e+00> : vector<128xf32>
    %21 = vector.multi_reduction <add>, %4, %cst_15 [0] : vector<16x128xf32> to vector<128xf32>
    %22 = vector.shape_cast %21 : vector<128xf32> to vector<1x128xf32>
    %23 = arith.addf %20, %22 : vector<1x128xf32>
    %c0_16 = arith.constant 0 : index
    %c0_17 = arith.constant 0 : index
    %24 = vector.load %arg7[%c0_16, %c0_17] : memref<1x128xf32, #tpu.memory_space<vmem>>, vector<1x128xf32>
    tpu.vector_store %arg7[%c0_16, %c0_17], %23 {strides = array<i32>} : memref<1x128xf32, #tpu.memory_space<vmem>>, vector<1x128xf32>,
    %c0_18 = arith.constant 0 : index
    %c0_19 = arith.constant 0 : index
    %25 = vector.load %arg5[%c0_18, %c0_19] : memref<1x128xf32, #tpu.memory_space<vmem>>, vector<1x128xf32>
    %26 = arith.mulf %3, %3 : vector<16x128xf32>
    %cst_20 = arith.constant dense<0.000000e+00> : vector<128xf32>
    %27 = vector.multi_reduction <add>, %26, %cst_20 [0] : vector<16x128xf32> to vector<128xf32>
    %28 = vector.shape_cast %27 : vector<128xf32> to vector<1x128xf32>
    %29 = arith.addf %25, %28 : vector<1x128xf32>
    %c0_21 = arith.constant 0 : index
    %c0_22 = arith.constant 0 : index
    %30 = vector.load %arg5[%c0_21, %c0_22] : memref<1x128xf32, #tpu.memory_space<vmem>>, vector<1x128xf32>
    tpu.vector_store %arg5[%c0_21, %c0_22], %29 {strides = array<i32>} : memref<1x128xf32, #tpu.memory_space<vmem>>, vector<1x128xf32>,
    %c0_23 = arith.constant 0 : index
    %c0_24 = arith.constant 0 : index
    %31 = vector.load %arg8[%c0_23, %c0_24] : memref<1x128xf32, #tpu.memory_space<vmem>>, vector<1x128xf32>
    %32 = arith.mulf %4, %4 : vector<16x128xf32>
    %cst_25 = arith.constant dense<0.000000e+00> : vector<128xf32>
    %33 = vector.multi_reduction <add>, %32, %cst_25 [0] : vector<16x128xf32> to vector<128xf32>
    %34 = vector.shape_cast %33 : vector<128xf32> to vector<1x128xf32>
    %35 = arith.addf %31, %34 : vector<1x128xf32>
    %c0_26 = arith.constant 0 : index
    %c0_27 = arith.constant 0 : index
    %36 = vector.load %arg8[%c0_26, %c0_27] : memref<1x128xf32, #tpu.memory_space<vmem>>, vector<1x128xf32>
    tpu.vector_store %arg8[%c0_26, %c0_27], %35 {strides = array<i32>} : memref<1x128xf32, #tpu.memory_space<vmem>>, vector<1x128xf32>,
    %c0_28 = arith.constant 0 : index
    %c0_29 = arith.constant 0 : index
    %37 = vector.load %arg6[%c0_28, %c0_29] : memref<128x128xf32, #tpu.memory_space<vmem>>, vector<128x128xf32>
    %cst_30 = arith.constant dense<0.000000e+00> : vector<128x128xf32>
    %38 = tpu.matmul %3, %3, %cst_30 {dimension_numbers = #tpu.dot_dimension_numbers<[0], [0], [1], [1], [0, 1, 1, 1], [], []>} : vector<16x128xf32>, vector<16x128xf32>, vector<128x128xf32> -> vector<128x128xf32>
    %39 = arith.addf %37, %38 : vector<128x128xf32>
    %c0_31 = arith.constant 0 : index
    %c0_32 = arith.constant 0 : index
    %40 = vector.load %arg6[%c0_31, %c0_32] : memref<128x128xf32, #tpu.memory_space<vmem>>, vector<128x128xf32>
    tpu.vector_store %arg6[%c0_31, %c0_32], %39 {strides = array<i32>} : memref<128x128xf32, #tpu.memory_space<vmem>>, vector<128x128xf32>,
    %c0_33 = arith.constant 0 : index
    %c0_34 = arith.constant 0 : index
    %41 = vector.load %arg9[%c0_33, %c0_34] : memref<128x128xf32, #tpu.memory_space<vmem>>, vector<128x128xf32>
    %cst_35 = arith.constant dense<0.000000e+00> : vector<128x128xf32>
    %42 = tpu.matmul %4, %4, %cst_35 {dimension_numbers = #tpu.dot_dimension_numbers<[0], [0], [1], [1], [0, 1, 1, 1], [], []>} : vector<16x128xf32>, vector<16x128xf32>, vector<128x128xf32> -> vector<128x128xf32>
    %43 = arith.addf %41, %42 : vector<128x128xf32>
    %c0_36 = arith.constant 0 : index
    %c0_37 = arith.constant 0 : index
    %44 = vector.load %arg9[%c0_36, %c0_37] : memref<128x128xf32, #tpu.memory_space<vmem>>, vector<128x128xf32>
    tpu.vector_store %arg9[%c0_36, %c0_37], %43 {strides = array<i32>} : memref<128x128xf32, #tpu.memory_space<vmem>>, vector<128x128xf32>,
    %c3_i32 = arith.constant 3 : i32
    %45 = arith.cmpi eq, %arg0, %c3_i32 : i32
    %46 = arith.extui %45 : i1 to i32
    %c0_i32_38 = arith.constant 0 : i32
    %47 = arith.cmpi ne, %46, %c0_i32_38 : i32
    scf.if %47 {
      %c0_39 = arith.constant 0 : index
      %c0_40 = arith.constant 0 : index
      %48 = vector.load %arg4[%c0_39, %c0_40] : memref<1x128xf32, #tpu.memory_space<vmem>>, vector<1x128xf32>
      %c0_41 = arith.constant 0 : index
      %c0_42 = arith.constant 0 : index
      %49 = vector.load %arg5[%c0_41, %c0_42] : memref<1x128xf32, #tpu.memory_space<vmem>>, vector<1x128xf32>
      %c0_43 = arith.constant 0 : index
      %c0_44 = arith.constant 0 : index
      %50 = vector.load %arg6[%c0_43, %c0_44] : memref<128x128xf32, #tpu.memory_space<vmem>>, vector<128x128xf32>
      %cst_45 = arith.constant 1.562500e-02 : f32
      %51 = vector.broadcast %cst_45 : f32 to vector<1x128xf32>
      %52 = arith.mulf %48, %51 : vector<1x128xf32>
      %cst_46 = arith.constant 6.400000e+01 : f32
      %53 = vector.broadcast %cst_46 : f32 to vector<1x128xf32>
      %54 = arith.mulf %53, %52 : vector<1x128xf32>
      %55 = arith.mulf %54, %52 : vector<1x128xf32>
      %56 = arith.subf %49, %55 : vector<1x128xf32>
      %cst_47 = arith.constant 0.0158730168 : f32
      %57 = vector.broadcast %cst_47 : f32 to vector<1x128xf32>
      %58 = arith.mulf %56, %57 : vector<1x128xf32>
      %cst_48 = arith.constant 9.99999974E-5 : f32
      %59 = vector.broadcast %cst_48 : f32 to vector<1x128xf32>
      %60 = arith.addf %58, %59 : vector<1x128xf32>
      %61 = math.sqrt %60 : vector<1x128xf32>
      %cst_49 = arith.constant 1.000000e+00 : f32
      %62 = vector.broadcast %cst_49 : f32 to vector<1x128xf32>
      %63 = arith.subf %62, %61 : vector<1x128xf32>
      %cst_50 = arith.constant 0.000000e+00 : f32
      %64 = vector.broadcast %cst_50 : f32 to vector<1x128xf32>
      %65 = arith.maximumf %63, %64 : vector<1x128xf32>
      %66 = vector.shape_cast %65 : vector<1x128xf32> to vector<1x1x128xf32>
      %cst_51 = arith.constant dense<0.000000e+00> : vector<1xf32>
      %67 = vector.multi_reduction <add>, %66, %cst_51 [1, 2] : vector<1x1x128xf32> to vector<1xf32>
      %68 = vector.shape_cast %67 : vector<1xf32> to vector<1x1x1xf32>
      %69 = vector.extract %68[0, 0, 0] : f32 from vector<1x1x1xf32>
      %70 = vector.broadcast %69 : f32 to vector<1x1xf32>
      %cst_52 = arith.constant 7.812500e-03 : f32
      %71 = vector.broadcast %cst_52 : f32 to vector<1x1xf32>
      %72 = arith.mulf %70, %71 : vector<1x1xf32>
      %73 = vector.shape_cast %52 : vector<1x128xf32> to vector<1x128xf32>
      %74 = vector.broadcast %73 : vector<1x128xf32> to vector<128x128xf32>
      %75 = tpu.transpose %74, [1, 0] : vector<128x128xf32> -> vector<128x128xf32>
      %76 = vector.broadcast %52 : vector<1x128xf32> to vector<128x128xf32>
      %77 = arith.mulf %75, %76 : vector<128x128xf32>
      %cst_53 = arith.constant 6.400000e+01 : f32
      %78 = vector.broadcast %cst_53 : f32 to vector<128x128xf32>
      %79 = arith.mulf %78, %77 : vector<128x128xf32>
      %80 = arith.subf %50, %79 : vector<128x128xf32>
      %81 = arith.mulf %80, %80 : vector<128x128xf32>
      %82 = vector.shape_cast %81 : vector<128x128xf32> to vector<1x128x128xf32>
      %cst_54 = arith.constant dense<0.000000e+00> : vector<1xf32>
      %83 = vector.multi_reduction <add>, %82, %cst_54 [1, 2] : vector<1x128x128xf32> to vector<1xf32>
      %84 = vector.shape_cast %83 : vector<1xf32> to vector<1x1x1xf32>
      %85 = vector.extract %84[0, 0, 0] : f32 from vector<1x1x1xf32>
      %86 = vector.broadcast %85 : f32 to vector<1x1xf32>
      %cst_55 = arith.constant 2.51952646E-4 : f32
      %87 = vector.broadcast %cst_55 : f32 to vector<1x1xf32>
      %88 = arith.mulf %86, %87 : vector<1x1xf32>
      %89 = arith.mulf %58, %58 : vector<1x128xf32>
      %90 = vector.shape_cast %89 : vector<1x128xf32> to vector<1x1x128xf32>
      %cst_56 = arith.constant dense<0.000000e+00> : vector<1xf32>
      %91 = vector.multi_reduction <add>, %90, %cst_56 [1, 2] : vector<1x1x128xf32> to vector<1xf32>
      %92 = vector.shape_cast %91 : vector<1xf32> to vector<1x1x1xf32>
      %93 = vector.extract %92[0, 0, 0] : f32 from vector<1x1x1xf32>
      %94 = vector.broadcast %93 : f32 to vector<1x1xf32>
      %95 = arith.subf %88, %94 : vector<1x1xf32>
      %cst_57 = arith.constant 7.812500e-03 : f32
      %96 = vector.broadcast %cst_57 : f32 to vector<1x1xf32>
      %97 = arith.mulf %95, %96 : vector<1x1xf32>
      %c0_58 = arith.constant 0 : index
      %c0_59 = arith.constant 0 : index
      %98 = vector.load %arg7[%c0_58, %c0_59] : memref<1x128xf32, #tpu.memory_space<vmem>>, vector<1x128xf32>
      %c0_60 = arith.constant 0 : index
      %c0_61 = arith.constant 0 : index
      %99 = vector.load %arg8[%c0_60, %c0_61] : memref<1x128xf32, #tpu.memory_space<vmem>>, vector<1x128xf32>
      %c0_62 = arith.constant 0 : index
      %c0_63 = arith.constant 0 : index
      %100 = vector.load %arg9[%c0_62, %c0_63] : memref<128x128xf32, #tpu.memory_space<vmem>>, vector<128x128xf32>
      %cst_64 = arith.constant 1.562500e-02 : f32
      %101 = vector.broadcast %cst_64 : f32 to vector<1x128xf32>
      %102 = arith.mulf %98, %101 : vector<1x128xf32>
      %cst_65 = arith.constant 6.400000e+01 : f32
      %103 = vector.broadcast %cst_65 : f32 to vector<1x128xf32>
      %104 = arith.mulf %103, %102 : vector<1x128xf32>
      %105 = arith.mulf %104, %102 : vector<1x128xf32>
      %106 = arith.subf %99, %105 : vector<1x128xf32>
      %cst_66 = arith.constant 0.0158730168 : f32
      %107 = vector.broadcast %cst_66 : f32 to vector<1x128xf32>
      %108 = arith.mulf %106, %107 : vector<1x128xf32>
      %cst_67 = arith.constant 9.99999974E-5 : f32
      %109 = vector.broadcast %cst_67 : f32 to vector<1x128xf32>
      %110 = arith.addf %108, %109 : vector<1x128xf32>
      %111 = math.sqrt %110 : vector<1x128xf32>
      %cst_68 = arith.constant 1.000000e+00 : f32
      %112 = vector.broadcast %cst_68 : f32 to vector<1x128xf32>
      %113 = arith.subf %112, %111 : vector<1x128xf32>
      %cst_69 = arith.constant 0.000000e+00 : f32
      %114 = vector.broadcast %cst_69 : f32 to vector<1x128xf32>
      %115 = arith.maximumf %113, %114 : vector<1x128xf32>
      %116 = vector.shape_cast %115 : vector<1x128xf32> to vector<1x1x128xf32>
      %cst_70 = arith.constant dense<0.000000e+00> : vector<1xf32>
      %117 = vector.multi_reduction <add>, %116, %cst_70 [1, 2] : vector<1x1x128xf32> to vector<1xf32>
      %118 = vector.shape_cast %117 : vector<1xf32> to vector<1x1x1xf32>
      %119 = vector.extract %118[0, 0, 0] : f32 from vector<1x1x1xf32>
      %120 = vector.broadcast %119 : f32 to vector<1x1xf32>
      %cst_71 = arith.constant 7.812500e-03 : f32
      %121 = vector.broadcast %cst_71 : f32 to vector<1x1xf32>
      %122 = arith.mulf %120, %121 : vector<1x1xf32>
      %123 = vector.shape_cast %102 : vector<1x128xf32> to vector<1x128xf32>
      %124 = vector.broadcast %123 : vector<1x128xf32> to vector<128x128xf32>
      %125 = tpu.transpose %124, [1, 0] : vector<128x128xf32> -> vector<128x128xf32>
      %126 = vector.broadcast %102 : vector<1x128xf32> to vector<128x128xf32>
      %127 = arith.mulf %125, %126 : vector<128x128xf32>
      %cst_72 = arith.constant 6.400000e+01 : f32
      %128 = vector.broadcast %cst_72 : f32 to vector<128x128xf32>
      %129 = arith.mulf %128, %127 : vector<128x128xf32>
      %130 = arith.subf %100, %129 : vector<128x128xf32>
      %131 = arith.mulf %130, %130 : vector<128x128xf32>
      %132 = vector.shape_cast %131 : vector<128x128xf32> to vector<1x128x128xf32>
      %cst_73 = arith.constant dense<0.000000e+00> : vector<1xf32>
      %133 = vector.multi_reduction <add>, %132, %cst_73 [1, 2] : vector<1x128x128xf32> to vector<1xf32>
      %134 = vector.shape_cast %133 : vector<1xf32> to vector<1x1x1xf32>
      %135 = vector.extract %134[0, 0, 0] : f32 from vector<1x1x1xf32>
      %136 = vector.broadcast %135 : f32 to vector<1x1xf32>
      %cst_74 = arith.constant 2.51952646E-4 : f32
      %137 = vector.broadcast %cst_74 : f32 to vector<1x1xf32>
      %138 = arith.mulf %136, %137 : vector<1x1xf32>
      %139 = arith.mulf %108, %108 : vector<1x128xf32>
      %140 = vector.shape_cast %139 : vector<1x128xf32> to vector<1x1x128xf32>
      %cst_75 = arith.constant dense<0.000000e+00> : vector<1xf32>
      %141 = vector.multi_reduction <add>, %140, %cst_75 [1, 2] : vector<1x1x128xf32> to vector<1xf32>
      %142 = vector.shape_cast %141 : vector<1xf32> to vector<1x1x1xf32>
      %143 = vector.extract %142[0, 0, 0] : f32 from vector<1x1x1xf32>
      %144 = vector.broadcast %143 : f32 to vector<1x1xf32>
      %145 = arith.subf %138, %144 : vector<1x1xf32>
      %cst_76 = arith.constant 7.812500e-03 : f32
      %146 = vector.broadcast %cst_76 : f32 to vector<1x1xf32>
      %147 = arith.mulf %145, %146 : vector<1x1xf32>
      %c0_77 = arith.constant 0 : index
      %c0_78 = arith.constant 0 : index
      %148 = vector.load %arg10[%c0_77, %c0_78] : memref<1x1xf32, #tpu.memory_space<vmem>>, vector<1x1xf32>
      %cst_79 = arith.constant 1.22070313E-4 : f32
      %149 = vector.broadcast %cst_79 : f32 to vector<1x1xf32>
      %150 = arith.mulf %148, %149 : vector<1x1xf32>
      %cst_80 = arith.constant 2.500000e+01 : f32
      %151 = vector.broadcast %cst_80 : f32 to vector<1x1xf32>
      %152 = arith.mulf %151, %150 : vector<1x1xf32>
      %153 = arith.addf %72, %122 : vector<1x1xf32>
      %cst_81 = arith.constant 2.500000e+01 : f32
      %154 = vector.broadcast %cst_81 : f32 to vector<1x1xf32>
      %155 = arith.mulf %154, %153 : vector<1x1xf32>
      %156 = arith.addf %152, %155 : vector<1x1xf32>
      %157 = arith.addf %97, %147 : vector<1x1xf32>
      %cst_82 = arith.constant 1.000000e+00 : f32
      %158 = vector.broadcast %cst_82 : f32 to vector<1x1xf32>
      %159 = arith.mulf %158, %157 : vector<1x1xf32>
      %160 = arith.addf %156, %159 : vector<1x1xf32>
      %c0_83 = arith.constant 0 : index
      %c0_84 = arith.constant 0 : index
      %161 = vector.load %arg3[%c0_83, %c0_84] : memref<1x1xf32, #tpu.memory_space<vmem>>, vector<1x1xf32>
      tpu.vector_store %arg3[%c0_83, %c0_84], %160 {strides = array<i32>} : memref<1x1xf32, #tpu.memory_space<vmem>>, vector<1x1xf32>,
    } else {
    }
    return
  }
  func.func @transform_0(%arg0: i32) -> (i32, i32) {
    %c0_i32 = arith.constant 0 : i32
    %c0_i32_0 = arith.constant 0 : i32
    return %arg0, %c0_i32 : i32, i32
  }
  func.func @transform_1(%arg0: i32) -> (i32, i32) {
    %c0_i32 = arith.constant 0 : i32
    %c0_i32_0 = arith.constant 0 : i32
    return %arg0, %c0_i32 : i32, i32
  }
  func.func @transform_2(%arg0: i32) -> (i32, i32) {
    %c0_i32 = arith.constant 0 : i32
    %c0_i32_0 = arith.constant 0 : i32
    %c0_i32_1 = arith.constant 0 : i32
    return %c0_i32, %c0_i32_0 : i32, i32
  }
}

</mosaic_0001>

<llo_original>
// kernel: tpu_custom_call.1
$region0: #{tpu_custom_call.1}
  #allocation0 [shape = 'u32[]', space=smem, size = 0x4, offset = 0x4, fixed_abs, tag = 'smem constant byte address 0x4 - core index']
  #allocation1 [shape = 'u32[72,128]{1,0:T(1,128)}', space=vmem, size = 0x9000, scoped, tag = 'internal scratch']
  #allocation2 [shape = 'f32[1,128]{1,0:T(1,128)}', space=vmem, size = 0x200, scoped, tag = 'scratch operand']
  #allocation3 [shape = 'f32[1,128]{1,0:T(1,128)}', space=vmem, size = 0x200, scoped, tag = 'scratch operand']
  #allocation4 [shape = 'f32[128,128]{1,0:T(8,128)}', space=vmem, size = 0x10000, scoped, tag = 'scratch operand']
  #allocation5 [shape = 'f32[1,128]{1,0:T(1,128)}', space=vmem, size = 0x200, scoped, tag = 'scratch operand']
  #allocation6 [shape = 'f32[1,128]{1,0:T(1,128)}', space=vmem, size = 0x200, scoped, tag = 'scratch operand']
  #allocation7 [shape = 'f32[128,128]{1,0:T(8,128)}', space=vmem, size = 0x10000, scoped, tag = 'scratch operand']
  #allocation8 [shape = 'f32[1,1]{1,0:T(1,128)}', space=vmem, size = 0x200, scoped, tag = 'scratch operand']
  %s0 = inlined_call_operand.hbm [shape: f32[64,128], index: 0, kind: input, shape index: {}]
  %s1 = inlined_call_operand.hbm [shape: f32[64,128], index: 1, kind: input, shape index: {}]
  %s2 = inlined_call_operand.hbm [shape: f32[1,1], index: 2, kind: output, shape index: {}]
  %s3 = sld [smem:[#allocation0]]
  $region57: #{tpu_custom_call.1} parent=0
    _
  %s5 = ssub.s32 1, %s3
  %s6 = scalar_select 0, %s5, %s3
  $region1: #{tpu_custom_call.1} parent=0
    #allocation9 [shape = 'u8[16384]{0}', space=vmem, size = 0x4000, scoped, tag = 'input window, operand 0']
    #allocation10 [shape = 's32[2]{0}', space=sflag, size = 0x8, scoped, tag = 'scoped memory for tpu_custom_call.1']
    #allocation11 [shape = 's32[2]{0}', space=sflag, size = 0x8, scoped, tag = 'scoped memory for tpu_custom_call.1']
    #allocation12 [shape = 'u8[16384]{0}', space=vmem, size = 0x4000, scoped, tag = 'input window, operand 1']
    #allocation13 [shape = 's32[2]{0}', space=sflag, size = 0x8, scoped, tag = 'scoped memory for tpu_custom_call.1']
    #allocation14 [shape = 'u8[512]{0}', space=vmem, size = 0x400, scoped, tag = 'output window, operand 0, single buffered']
    %7 = vsyncpa [#allocation10], 0
    %s8 = scalar_lea.sflag [#allocation10], 1
    %9 = vsyncpa %s8, 0
    %10 = vsyncpa [#allocation13], 0
    %s11 = scalar_lea.sflag [#allocation13], 1
    %12 = vsyncpa %s11, 0
    %13 = vsyncpa [#allocation11], 0
    loop: start=0, step=1, limit=6
    $region2: #{tpu_custom_call.1} parent=1 // loop_pre_header
      _
    $region3: #{tpu_custom_call.1} parent=1 // loop_header
      %s15 = sphi 0, %s19
      %p16 = scmp.ge.s32.totalorder %s15, 6
      %s25 = sphi 0, %s27
      %s28 = sphi 0, %s25
      %s29 = sphi 0, %s28
      %s45 = sphi 0, %s29
      %s51 = sphi 0, %s53
      %s54 = sphi 0, %s51
      %s55 = sphi 0, %s54
      %s71 = sphi 0, %s55
      %s75 = sphi 0, %s75
      %s77 = sphi 0, %s75
      %s78 = sphi 0, %s77
      %s92 = sphi 0, %s78
    $region4: #{tpu_custom_call.1} parent=1 // loop_header_branch
      %18 = sbr.rel (%p16) target = $region8
    $region5: #{tpu_custom_call.1} parent=1 // loop_body
      %s20 = ssub.s32 %s15, 1
      %s21 = ssub.s32 %s15, 2
      %s22 = sadd.s32 %s15, 1
      %s23 = ssub.s32 %s15, %s22
      %p24 = scmp.eq.s32.totalorder %s23, 0
      %s26 = sadd.s32 %s25, 1
      %s27 = scalar_select %p24, %s25, %s26
      %p30 = pneg %p24
      %p31 = scmp.eq.s32.totalorder %s15, 3
      %p32 = por %p30, %p31
      %p33 = scmp.ne.s32.totalorder %s25, %s28
      %p34 = scmp.eq.s32.totalorder %s15, 0
      %p35 = por %p33, %p34
      %p36 = scmp.ne.s32.totalorder %s25, %s28
      %p37 = scmp.eq.s32.totalorder %s20, 3
      %p38 = por %p36, %p37
      %p39 = scmp.ne.s32.totalorder %s28, %s29
      %p40 = scmp.eq.s32.totalorder %s20, 0
      %p41 = por %p39, %p40
      %p42 = scmp.ne.s32.totalorder %s28, %s29
      %p43 = scmp.eq.s32.totalorder %s21, 3
      %p44 = por %p42, %p43
      %p46 = scmp.ne.s32.totalorder %s29, %s45
      %p47 = scmp.eq.s32.totalorder %s21, 0
      %p48 = por %p46, %p47
      %s49 = ssub.s32 %s15, %s22
      %p50 = scmp.eq.s32.totalorder %s49, 0
      %s52 = sadd.s32 %s51, 1
      %s53 = scalar_select %p50, %s51, %s52
      %p56 = pneg %p50
      %p57 = scmp.eq.s32.totalorder %s15, 3
      %p58 = por %p56, %p57
      %p59 = scmp.ne.s32.totalorder %s51, %s54
      %p60 = scmp.eq.s32.totalorder %s15, 0
      %p61 = por %p59, %p60
      %p62 = scmp.ne.s32.totalorder %s51, %s54
      %p63 = scmp.eq.s32.totalorder %s20, 3
      %p64 = por %p62, %p63
      %p65 = scmp.ne.s32.totalorder %s54, %s55
      %p66 = scmp.eq.s32.totalorder %s20, 0
      %p67 = por %p65, %p66
      %p68 = scmp.ne.s32.totalorder %s54, %s55
      %p69 = scmp.eq.s32.totalorder %s21, 3
      %p70 = por %p68, %p69
      %p72 = scmp.ne.s32.totalorder %s55, %s71
      %p73 = scmp.eq.s32.totalorder %s21, 0
      %p74 = por %p72, %p73
      %s76 = sadd.s32 %s75, 1
      %p79 = scmp.eq.s32.totalorder %s15, 3
      %p80 = scmp.ne.s32.totalorder %s75, %s77
      %p81 = scmp.eq.s32.totalorder %s15, 0
      %p82 = por %p80, %p81
      %p83 = scmp.ne.s32.totalorder %s75, %s77
      %p84 = scmp.eq.s32.totalorder %s20, 3
      %p85 = por %p83, %p84
      %p86 = scmp.ne.s32.totalorder %s77, %s78
      %p87 = scmp.eq.s32.totalorder %s20, 0
      %p88 = por %p86, %p87
      %p89 = scmp.ne.s32.totalorder %s77, %s78
      %p90 = scmp.eq.s32.totalorder %s21, 3
      %p91 = por %p89, %p90
      %p93 = scmp.ne.s32.totalorder %s78, %s92
      %p94 = scmp.eq.s32.totalorder %s21, 0
      %p95 = por %p93, %p94
      %p96 = scmp.le.s32.totalorder 1, %s15
      %p97 = scmp.lt.s32.totalorder %s15, 5
      %p98 = pnand %p96, %p97
      %p99 = pneg %p98
      // Predicated region
      $region9: #{tpu_custom_call.1} parent=5 // pred_check
        _
      $region10: #{tpu_custom_call.1} parent=5 // pred_check_branch
        %101 = sbr.rel (%p98) target = $region12
      $region11: #{tpu_custom_call.1} parent=5 // pred_region
        %s102 = ssub.s32 %s15, 1
      $region12: #{tpu_custom_call.1} parent=5 // pred_fallthru
        _
      %p103 = scmp.lt.s32.totalorder %s15, 4
      // Predicated region
      $region13: #{tpu_custom_call.1} parent=5 // pred_check
        %p104 = pneg %p103
      $region14: #{tpu_custom_call.1} parent=5 // pred_check_branch
        %106 = sbr.rel (%p104) target = $region16
      $region15: #{tpu_custom_call.1} parent=5 // pred_region
        // Predicated region
        $region17: #{tpu_custom_call.1} parent=15 // pred_check
          %p107 = pneg %p35
        $region18: #{tpu_custom_call.1} parent=15 // pred_check_branch
          %109 = sbr.rel (%p107) target = $region20
        $region19: #{tpu_custom_call.1} parent=15 // pred_region
          %s110 = sand.u32 %s25, 1
          %s111 = scalar_lea.sflag [#allocation10], %s110
          %s112 = sand.u32 %s25, 1
          %s113 = smul.addr %s112, 16
          %s114 = scalar_lea.vmem [#allocation9], %s113
          %s115 = smul.u32 2, %s15
          %117 = vsyncadd %s111, 0
          %s118 = smul.addr %s115, 8
          %s119 = scalar_lea.hbm %s0, %s118
          %s120 = sshll.u32 %s119, 4
          %s121 = int_to_ptr.hbm [resolvable:$true] %s120
          %s122 = sshll.u32 %s114, 4
          %s123 = int_to_ptr.vmem [resolvable:$true] %s122
          %128 = dma.hbm_to_vmem [thread:$0]  %s121, 256, %s123, %s111, 128, 128, 8
        $region20: #{tpu_custom_call.1} parent=15 // pred_fallthru
          _
        // Predicated region
        $region21: #{tpu_custom_call.1} parent=15 // pred_check
          %p129 = pneg %p61
        $region22: #{tpu_custom_call.1} parent=15 // pred_check_branch
          %131 = sbr.rel (%p129) target = $region24
        $region23: #{tpu_custom_call.1} parent=15 // pred_region
          %s132 = sand.u32 %s51, 1
          %s133 = scalar_lea.sflag [#allocation13], %s132
          %s134 = sand.u32 %s51, 1
          %s135 = smul.addr %s134, 16
          %s136 = scalar_lea.vmem [#allocation12], %s135
          %s137 = smul.u32 2, %s15
          %139 = vsyncadd %s133, 0
          %s140 = smul.addr %s137, 8
          %s141 = scalar_lea.hbm %s1, %s140
          %s142 = sshll.u32 %s141, 4
          %s143 = int_to_ptr.hbm [resolvable:$true] %s142
          %s144 = sshll.u32 %s136, 4
          %s145 = int_to_ptr.vmem [resolvable:$true] %s144
          %150 = dma.hbm_to_vmem [thread:$0]  %s143, 256, %s145, %s133, 128, 128, 8
        $region24: #{tpu_custom_call.1} parent=15 // pred_fallthru
          _
      $region16: #{tpu_custom_call.1} parent=5 // pred_fallthru
        _
      %p151 = scmp.le.s32.totalorder 1, %s15
      %p152 = scmp.lt.s32.totalorder %s15, 5
      %p153 = pnand %p151, %p152
      %p154 = pneg %p153
      // Predicated region
      $region25: #{tpu_custom_call.1} parent=5 // pred_check
        _
      $region26: #{tpu_custom_call.1} parent=5 // pred_check_branch
        %156 = sbr.rel (%p153) target = $region28
      $region27: #{tpu_custom_call.1} parent=5 // pred_region
        %s157 = ssub.s32 %s15, 1
        %s158 = sand.u32 %s28, 1
        %s159 = scalar_lea.sflag [#allocation10], %s158
        %s160 = sand.u32 %s28, 1
        %s161 = smul.addr %s160, 16
        %s162 = scalar_lea.vmem [#allocation9], %s161
        // Predicated region
        $region29: #{tpu_custom_call.1} parent=27 // pred_check
          %p163 = pneg %p41
        $region30: #{tpu_custom_call.1} parent=27 // pred_check_branch
          %165 = sbr.rel (%p163) target = $region32
        $region31: #{tpu_custom_call.1} parent=27 // pred_region
          %167 = dma.done %s159, 256
        $region32: #{tpu_custom_call.1} parent=27 // pred_fallthru
          _
        %s168 = sand.u32 %s54, 1
        %s169 = scalar_lea.sflag [#allocation13], %s168
        %s170 = sand.u32 %s54, 1
        %s171 = smul.addr %s170, 16
        %s172 = scalar_lea.vmem [#allocation12], %s171
        // Predicated region
        $region33: #{tpu_custom_call.1} parent=27 // pred_check
          %p173 = pneg %p67
        $region34: #{tpu_custom_call.1} parent=27 // pred_check_branch
          %175 = sbr.rel (%p173) target = $region36
        $region35: #{tpu_custom_call.1} parent=27 // pred_region
          %177 = dma.done %s169, 256
        $region36: #{tpu_custom_call.1} parent=27 // pred_fallthru
          _
        %s178 = sand.u32 %s28, 1
        %s179 = scalar_lea.sflag [#allocation10], %s178
        %s180 = sand.u32 %s28, 1
        %s181 = smul.addr %s180, 16
        %s182 = scalar_lea.vmem [#allocation9], %s181
        %p183 = pneg %p41
        %p184 = pneg %p38
        %s185 = sand.u32 %s54, 1
        %s186 = scalar_lea.sflag [#allocation13], %s185
        %s187 = sand.u32 %s54, 1
        %s188 = smul.addr %s187, 16
        %s189 = scalar_lea.vmem [#allocation12], %s188
        %p190 = pneg %p67
        %p191 = pneg %p64
        %p192 = pneg %p88
        %p193 = pneg %p85
        %s194 = smul.u32 2, %s20
        %s195 = smul.u32 2, %s20
        %p196 = scmp.eq.s32.totalorder %s20, 0
        // Predicated region
        $region37: #{tpu_custom_call.1} parent=27 // pred_check
          %p197 = pneg %p196
        $region38: #{tpu_custom_call.1} parent=27 // pred_check_branch
          %199 = sbr.rel (%p197) target = $region40
        $region39: #{tpu_custom_call.1} parent=27 // pred_region
          %200 = vst [vmem:[#allocation2] sm:$0x1] 0.0
          %201 = vst [vmem:[#allocation3] sm:$0x1] 0.0
          %202 = vst [vmem:[#allocation4] sm:$0xff] 0.0
          %203 = vst [vmem:[#allocation4 + $0x8] sm:$0xff] 0.0
          %204 = vst [vmem:[#allocation4 + $0x10] sm:$0xff] 0.0
          %205 = vst [vmem:[#allocation4 + $0x18] sm:$0xff] 0.0
          %206 = vst [vmem:[#allocation4 + $0x20] sm:$0xff] 0.0
          %207 = vst [vmem:[#allocation4 + $0x28] sm:$0xff] 0.0
          %208 = vst [vmem:[#allocation4 + $0x30] sm:$0xff] 0.0
          %209 = vst [vmem:[#allocation4 + $0x38] sm:$0xff] 0.0
          %210 = vst [vmem:[#allocation4 + $0x40] sm:$0xff] 0.0
          %211 = vst [vmem:[#allocation4 + $0x48] sm:$0xff] 0.0
          %212 = vst [vmem:[#allocation4 + $0x50] sm:$0xff] 0.0
          %213 = vst [vmem:[#allocation4 + $0x58] sm:$0xff] 0.0
          %214 = vst [vmem:[#allocation4 + $0x60] sm:$0xff] 0.0
          %215 = vst [vmem:[#allocation4 + $0x68] sm:$0xff] 0.0
          %216 = vst [vmem:[#allocation4 + $0x70] sm:$0xff] 0.0
          %217 = vst [vmem:[#allocation4 + $0x78] sm:$0xff] 0.0
          %218 = vst [vmem:[#allocation5] sm:$0x1] 0.0
          %219 = vst [vmem:[#allocation6] sm:$0x1] 0.0
          %220 = vst [vmem:[#allocation7] sm:$0xff] 0.0
          %221 = vst [vmem:[#allocation7 + $0x8] sm:$0xff] 0.0
          %222 = vst [vmem:[#allocation7 + $0x10] sm:$0xff] 0.0
          %223 = vst [vmem:[#allocation7 + $0x18] sm:$0xff] 0.0
          %224 = vst [vmem:[#allocation7 + $0x20] sm:$0xff] 0.0
          %225 = vst [vmem:[#allocation7 + $0x28] sm:$0xff] 0.0
          %226 = vst [vmem:[#allocation7 + $0x30] sm:$0xff] 0.0
          %227 = vst [vmem:[#allocation7 + $0x38] sm:$0xff] 0.0
          %228 = vst [vmem:[#allocation7 + $0x40] sm:$0xff] 0.0
          %229 = vst [vmem:[#allocation7 + $0x48] sm:$0xff] 0.0
          %230 = vst [vmem:[#allocation7 + $0x50] sm:$0xff] 0.0
          %231 = vst [vmem:[#allocation7 + $0x58] sm:$0xff] 0.0
          %232 = vst [vmem:[#allocation7 + $0x60] sm:$0xff] 0.0
          %233 = vst [vmem:[#allocation7 + $0x68] sm:$0xff] 0.0
          %234 = vst [vmem:[#allocation7 + $0x70] sm:$0xff] 0.0
          %235 = vst [vmem:[#allocation7 + $0x78] sm:$0xff] 0.0
          %vm236 = vcmask 0
          %237 = vst.msk [vmem:[#allocation8] sm:$0x1] %vm236, 0.0
        $region40: #{tpu_custom_call.1} parent=27 // pred_fallthru
          _
        %v238 = vld [vmem:[%s162] sm:$0xff]
        %v239 = vld [vmem:[%s162 + $0x8] sm:$0xff]
        %v240 = vld [vmem:[%s172] sm:$0xff]
        %v241 = vld [vmem:[%s172 + $0x8] sm:$0xff]
        %v242 = vsub.f32 %v238, %v240
        %v243 = vsub.f32 %v239, %v241
        %v244 = vld [vmem:[#allocation8] sm:$0x1]
        %v245 = vmul.f32 %v242, %v242
        %v246 = vmul.f32 %v243, %v243
        %v247 = vadd.f32 %v245, %v246
        %248 = vadd.xlane.f32.xlu0 %v247
        %v249 = vpop.xlane.xlu0 %248
        %v250 = vrot.slane %v249, 4
        %v251 = vadd.f32 %v249, %v250
        %v252 = vrot.slane %v251, 2
        %v253 = vadd.f32 %v251, %v252
        %v254 = vrot.slane %v253, 1
        %v255 = vadd.f32 %v253, %v254
        %s256 = vtos %v255
        %v257 = vstv %s256
        %v258 = vadd.f32 %v244, %v257
        %vm259 = vcmask 0
        %260 = vst.msk [vmem:[#allocation8] sm:$0x1] %vm259, %v258
        %v261 = vld [vmem:[#allocation2] sm:$0x1]
        %v262 = vadd.f32 %v238, %v239
        %v263 = vrot.slane %v262, 4
        %v264 = vadd.f32 %v262, %v263
        %v265 = vrot.slane %v264, 2
        %v266 = vadd.f32 %v264, %v265
        %v267 = vrot.slane %v266, 1
        %v268 = vadd.f32 %v266, %v267
        %v269 = vadd.f32 %v261, %v268
        %270 = vst [vmem:[#allocation2] sm:$0x1] %v269
        %v271 = vld [vmem:[#allocation5] sm:$0x1]
        %v272 = vadd.f32 %v240, %v241
        %v273 = vrot.slane %v272, 4
        %v274 = vadd.f32 %v272, %v273
        %v275 = vrot.slane %v274, 2
        %v276 = vadd.f32 %v274, %v275
        %v277 = vrot.slane %v276, 1
        %v278 = vadd.f32 %v276, %v277
        %v279 = vadd.f32 %v271, %v278
        %280 = vst [vmem:[#allocation5] sm:$0x1] %v279
        %v281 = vld [vmem:[#allocation3] sm:$0x1]
        %v282 = vmul.f32 %v238, %v238
        %v283 = vmul.f32 %v239, %v239
        %v284 = vadd.f32 %v282, %v283
        %v285 = vrot.slane %v284, 4
        %v286 = vadd.f32 %v284, %v285
        %v287 = vrot.slane %v286, 2
        %v288 = vadd.f32 %v286, %v287
        %v289 = vrot.slane %v288, 1
        %v290 = vadd.f32 %v288, %v289
        %v291 = vadd.f32 %v281, %v290
        %292 = vst [vmem:[#allocation3] sm:$0x1] %v291
        %v293 = vld [vmem:[#allocation6] sm:$0x1]
        %v294 = vmul.f32 %v240, %v240
        %v295 = vmul.f32 %v241, %v241
        %v296 = vadd.f32 %v294, %v295
        %v297 = vrot.slane %v296, 4
        %v298 = vadd.f32 %v296, %v297
        %v299 = vrot.slane %v298, 2
        %v300 = vadd.f32 %v298, %v299
        %v301 = vrot.slane %v300, 1
        %v302 = vadd.f32 %v300, %v301
        %v303 = vadd.f32 %v293, %v302
        %304 = vst [vmem:[#allocation6] sm:$0x1] %v303
        %v305 = vld [vmem:[#allocation4] sm:$0xff]
        %v306 = vld [vmem:[#allocation4 + $0x8] sm:$0xff]
        %v307 = vld [vmem:[#allocation4 + $0x10] sm:$0xff]
        %v308 = vld [vmem:[#allocation4 + $0x18] sm:$0xff]
        %v309 = vld [vmem:[#allocation4 + $0x20] sm:$0xff]
        %v310 = vld [vmem:[#allocation4 + $0x28] sm:$0xff]
        %v311 = vld [vmem:[#allocation4 + $0x30] sm:$0xff]
        %v312 = vld [vmem:[#allocation4 + $0x38] sm:$0xff]
        %v313 = vld [vmem:[#allocation4 + $0x40] sm:$0xff]
        %v314 = vld [vmem:[#allocation4 + $0x48] sm:$0xff]
        %v315 = vld [vmem:[#allocation4 + $0x50] sm:$0xff]
        %v316 = vld [vmem:[#allocation4 + $0x58] sm:$0xff]
        %v317 = vld [vmem:[#allocation4 + $0x60] sm:$0xff]
        %v318 = vld [vmem:[#allocation4 + $0x68] sm:$0xff]
        %v319 = vld [vmem:[#allocation4 + $0x70] sm:$0xff]
        %v320 = vld [vmem:[#allocation4 + $0x78] sm:$0xff]
        %321 = vxpose.xlu0.b32.start [1/16] %v238, 128
        %322 = vxpose.xlu0.b32.cont [2/16] %v239, 128
        %323 = vxpose.xlu0.b32.cont [3/16] 0.0, 128
        %324 = vxpose.xlu0.b32.cont [4/16] 0.0, 128
        %325 = vxpose.xlu0.b32.cont [5/16] 0.0, 128
        %326 = vxpose.xlu0.b32.cont [6/16] 0.0, 128
        %327 = vxpose.xlu0.b32.cont [7/16] 0.0, 128
        %328 = vxpose.xlu0.b32.cont [8/16] 0.0, 128
        %329 = vxpose.xlu0.b32.cont [9/16] 0.0, 128
        %330 = vxpose.xlu0.b32.cont [10/16] 0.0, 128
        %331 = vxpose.xlu0.b32.cont [11/16] 0.0, 128
        %332 = vxpose.xlu0.b32.cont [12/16] 0.0, 128
        %333 = vxpose.xlu0.b32.cont [13/16] 0.0, 128
        %334 = vxpose.xlu0.b32.cont [14/16] 0.0, 128
        %335 = vxpose.xlu0.b32.cont [15/16] 0.0, 128
        %336 = vxpose.xlu0.b32.end [16/16] 0.0, 128
        %v337 = vpop.trf.xlu0
        %v338 = vpop.trf.xlu0
        %v339 = vpop.trf.xlu0
        %v340 = vpop.trf.xlu0
        %v341 = vpop.trf.xlu0
        %v342 = vpop.trf.xlu0
        %v343 = vpop.trf.xlu0
        %v344 = vpop.trf.xlu0
        %v345 = vpop.trf.xlu0
        %v346 = vpop.trf.xlu0
        %v347 = vpop.trf.xlu0
        %v348 = vpop.trf.xlu0
        %v349 = vpop.trf.xlu0
        %v350 = vpop.trf.xlu0
        %v351 = vpop.trf.xlu0
        %v352 = vpop.trf.xlu0
        %vm353 = vcmask 130048
        %v355 = vsel %vm353, %v337, 0
        %v358 = vsel %vm353, %v338, 0
        %v361 = vsel %vm353, %v339, 0
        %v364 = vsel %vm353, %v340, 0
        %v367 = vsel %vm353, %v341, 0
        %v370 = vsel %vm353, %v342, 0
        %v373 = vsel %vm353, %v343, 0
        %v376 = vsel %vm353, %v344, 0
        %v379 = vsel %vm353, %v345, 0
        %v382 = vsel %vm353, %v346, 0
        %v385 = vsel %vm353, %v347, 0
        %v388 = vsel %vm353, %v348, 0
        %v391 = vsel %vm353, %v349, 0
        %v394 = vsel %vm353, %v350, 0
        %v397 = vsel %vm353, %v351, 0
        %v400 = vsel %vm353, %v352, 0
        %402 = vmatpush.msra.mxu0 0.0
        %403 = vmatpush.msra.mxu0 0.0
        %404 = vmatpush.msra.mxu0 0.0
        %405 = vmatpush.msra.mxu0 0.0
        %406 = vmatpush.msra.mxu0 0.0
        %407 = vmatpush.msra.mxu0 0.0
        %408 = vmatpush.msra.mxu0 0.0
        %409 = vmatpush.msra.mxu0 0.0
        %410 = vmatpush.msra.mxu0 0.0
        %411 = vmatpush.msra.mxu0 0.0
        %412 = vmatpush.msra.mxu0 0.0
        %413 = vmatpush.msra.mxu0 0.0
        %414 = vmatpush.msra.mxu0 0.0
        %415 = vmatpush.msra.mxu0 0.0
        %416 = vmatpush.msra.mxu0 %v239
        %417 = vmatpush.msra.mxu0 %v238
        %418 = vmatmul.f32.gmra.mxu0 %v355
        %v419 = vpop.f32.mrf.mxu0
        %v420 = vadd.f32 0.0, %v419
        %421 = vmatmul.f32.gmra.mxu0 %v358
        %v422 = vpop.f32.mrf.mxu0
        %v423 = vadd.f32 0.0, %v422
        %424 = vmatmul.f32.gmra.mxu0 %v361
        %v425 = vpop.f32.mrf.mxu0
        %v426 = vadd.f32 0.0, %v425
        %427 = vmatmul.f32.gmra.mxu0 %v364
        %v428 = vpop.f32.mrf.mxu0
        %v429 = vadd.f32 0.0, %v428
        %430 = vmatmul.f32.gmra.mxu0 %v367
        %v431 = vpop.f32.mrf.mxu0
        %v432 = vadd.f32 0.0, %v431
        %433 = vmatmul.f32.gmra.mxu0 %v370
        %v434 = vpop.f32.mrf.mxu0
        %v435 = vadd.f32 0.0, %v434
        %436 = vmatmul.f32.gmra.mxu0 %v373
        %v437 = vpop.f32.mrf.mxu0
        %v438 = vadd.f32 0.0, %v437
        %439 = vmatmul.f32.gmra.mxu0 %v376
        %v440 = vpop.f32.mrf.mxu0
        %v441 = vadd.f32 0.0, %v440
        %442 = vmatmul.f32.gmra.mxu0 %v379
        %v443 = vpop.f32.mrf.mxu0
        %v444 = vadd.f32 0.0, %v443
        %445 = vmatmul.f32.gmra.mxu0 %v382
        %v446 = vpop.f32.mrf.mxu0
        %v447 = vadd.f32 0.0, %v446
        %448 = vmatmul.f32.gmra.mxu0 %v385
        %v449 = vpop.f32.mrf.mxu0
        %v450 = vadd.f32 0.0, %v449
        %451 = vmatmul.f32.gmra.mxu0 %v388
        %v452 = vpop.f32.mrf.mxu0
        %v453 = vadd.f32 0.0, %v452
        %454 = vmatmul.f32.gmra.mxu0 %v391
        %v455 = vpop.f32.mrf.mxu0
        %v456 = vadd.f32 0.0, %v455
        %457 = vmatmul.f32.gmra.mxu0 %v394
        %v458 = vpop.f32.mrf.mxu0
        %v459 = vadd.f32 0.0, %v458
        %460 = vmatmul.f32.gmra.mxu0 %v397
        %v461 = vpop.f32.mrf.mxu0
        %v462 = vadd.f32 0.0, %v461
        %463 = vmatmul.f32.gmra.mxu0 %v400
        %v464 = vpop.f32.mrf.mxu0
        %v465 = vadd.f32 0.0, %v464
        %466 = vdwg.mxu0
        %v467 = vadd.f32 %v305, %v420
        %v468 = vadd.f32 %v306, %v423
        %v469 = vadd.f32 %v307, %v426
        %v470 = vadd.f32 %v308, %v429
        %v471 = vadd.f32 %v309, %v432
        %v472 = vadd.f32 %v310, %v435
        %v473 = vadd.f32 %v311, %v438
        %v474 = vadd.f32 %v312, %v441
        %v475 = vadd.f32 %v313, %v444
        %v476 = vadd.f32 %v314, %v447
        %v477 = vadd.f32 %v315, %v450
        %v478 = vadd.f32 %v316, %v453
        %v479 = vadd.f32 %v317, %v456
        %v480 = vadd.f32 %v318, %v459
        %v481 = vadd.f32 %v319, %v462
        %v482 = vadd.f32 %v320, %v465
        %483 = vst [vmem:[#allocation4] sm:$0xff] %v467
        %484 = vst [vmem:[#allocation4 + $0x8] sm:$0xff] %v468
        %485 = vst [vmem:[#allocation4 + $0x10] sm:$0xff] %v469
        %486 = vst [vmem:[#allocation4 + $0x18] sm:$0xff] %v470
        %487 = vst [vmem:[#allocation4 + $0x20] sm:$0xff] %v471
        %488 = vst [vmem:[#allocation4 + $0x28] sm:$0xff] %v472
        %489 = vst [vmem:[#allocation4 + $0x30] sm:$0xff] %v473
        %490 = vst [vmem:[#allocation4 + $0x38] sm:$0xff] %v474
        %491 = vst [vmem:[#allocation4 + $0x40] sm:$0xff] %v475
        %492 = vst [vmem:[#allocation4 + $0x48] sm:$0xff] %v476
        %493 = vst [vmem:[#allocation4 + $0x50] sm:$0xff] %v477
        %494 = vst [vmem:[#allocation4 + $0x58] sm:$0xff] %v478
        %495 = vst [vmem:[#allocation4 + $0x60] sm:$0xff] %v479
        %496 = vst [vmem:[#allocation4 + $0x68] sm:$0xff] %v480
        %497 = vst [vmem:[#allocation4 + $0x70] sm:$0xff] %v481
        %498 = vst [vmem:[#allocation4 + $0x78] sm:$0xff] %v482
        %v499 = vld [vmem:[#allocation7] sm:$0xff]
        %v500 = vld [vmem:[#allocation7 + $0x8] sm:$0xff]
        %v501 = vld [vmem:[#allocation7 + $0x10] sm:$0xff]
        %v502 = vld [vmem:[#allocation7 + $0x18] sm:$0xff]
        %v503 = vld [vmem:[#allocation7 + $0x20] sm:$0xff]
        %v504 = vld [vmem:[#allocation7 + $0x28] sm:$0xff]
        %v505 = vld [vmem:[#allocation7 + $0x30] sm:$0xff]
        %v506 = vld [vmem:[#allocation7 + $0x38] sm:$0xff]
        %v507 = vld [vmem:[#allocation7 + $0x40] sm:$0xff]
        %v508 = vld [vmem:[#allocation7 + $0x48] sm:$0xff]
        %v509 = vld [vmem:[#allocation7 + $0x50] sm:$0xff]
        %v510 = vld [vmem:[#allocation7 + $0x58] sm:$0xff]
        %v511 = vld [vmem:[#allocation7 + $0x60] sm:$0xff]
        %v512 = vld [vmem:[#allocation7 + $0x68] sm:$0xff]
        %v513 = vld [vmem:[#allocation7 + $0x70] sm:$0xff]
        %v514 = vld [vmem:[#allocation7 + $0x78] sm:$0xff]
        %515 = vxpose.xlu0.b32.start [1/16] %v240, 128
        %516 = vxpose.xlu0.b32.cont [2/16] %v241, 128
        %517 = vxpose.xlu0.b32.cont [3/16] 0.0, 128
        %518 = vxpose.xlu0.b32.cont [4/16] 0.0, 128
        %519 = vxpose.xlu0.b32.cont [5/16] 0.0, 128
        %520 = vxpose.xlu0.b32.cont [6/16] 0.0, 128
        %521 = vxpose.xlu0.b32.cont [7/16] 0.0, 128
        %522 = vxpose.xlu0.b32.cont [8/16] 0.0, 128
        %523 = vxpose.xlu0.b32.cont [9/16] 0.0, 128
        %524 = vxpose.xlu0.b32.cont [10/16] 0.0, 128
        %525 = vxpose.xlu0.b32.cont [11/16] 0.0, 128
        %526 = vxpose.xlu0.b32.cont [12/16] 0.0, 128
        %527 = vxpose.xlu0.b32.cont [13/16] 0.0, 128
        %528 = vxpose.xlu0.b32.cont [14/16] 0.0, 128
        %529 = vxpose.xlu0.b32.cont [15/16] 0.0, 128
        %530 = vxpose.xlu0.b32.end [16/16] 0.0, 128
        %v531 = vpop.trf.xlu0
        %v532 = vpop.trf.xlu0
        %v533 = vpop.trf.xlu0
        %v534 = vpop.trf.xlu0
        %v535 = vpop.trf.xlu0
        %v536 = vpop.trf.xlu0
        %v537 = vpop.trf.xlu0
        %v538 = vpop.trf.xlu0
        %v539 = vpop.trf.xlu0
        %v540 = vpop.trf.xlu0
        %v541 = vpop.trf.xlu0
        %v542 = vpop.trf.xlu0
        %v543 = vpop.trf.xlu0
        %v544 = vpop.trf.xlu0
        %v545 = vpop.trf.xlu0
        %v546 = vpop.trf.xlu0
        %v548 = vsel %vm353, %v531, 0
        %v551 = vsel %vm353, %v532, 0
        %v554 = vsel %vm353, %v533, 0
        %v557 = vsel %vm353, %v534, 0
        %v560 = vsel %vm353, %v535, 0
        %v563 = vsel %vm353, %v536, 0
        %v566 = vsel %vm353, %v537, 0
        %v569 = vsel %vm353, %v538, 0
        %v572 = vsel %vm353, %v539, 0
        %v575 = vsel %vm353, %v540, 0
        %v578 = vsel %vm353, %v541, 0
        %v581 = vsel %vm353, %v542, 0
        %v584 = vsel %vm353, %v543, 0
        %v587 = vsel %vm353, %v544, 0
        %v590 = vsel %vm353, %v545, 0
        %v593 = vsel %vm353, %v546, 0
        %595 = vmatpush.msra.mxu0 0.0
        %596 = vmatpush.msra.mxu0 0.0
        %597 = vmatpush.msra.mxu0 0.0
        %598 = vmatpush.msra.mxu0 0.0
        %599 = vmatpush.msra.mxu0 0.0
        %600 = vmatpush.msra.mxu0 0.0
        %601 = vmatpush.msra.mxu0 0.0
        %602 = vmatpush.msra.mxu0 0.0
        %603 = vmatpush.msra.mxu0 0.0
        %604 = vmatpush.msra.mxu0 0.0
        %605 = vmatpush.msra.mxu0 0.0
        %606 = vmatpush.msra.mxu0 0.0
        %607 = vmatpush.msra.mxu0 0.0
        %608 = vmatpush.msra.mxu0 0.0
        %609 = vmatpush.msra.mxu0 %v241
        %610 = vmatpush.msra.mxu0 %v240
        %611 = vmatmul.f32.gmra.mxu0 %v548
        %v612 = vpop.f32.mrf.mxu0
        %v613 = vadd.f32 0.0, %v612
        %614 = vmatmul.f32.gmra.mxu0 %v551
        %v615 = vpop.f32.mrf.mxu0
        %v616 = vadd.f32 0.0, %v615
        %617 = vmatmul.f32.gmra.mxu0 %v554
        %v618 = vpop.f32.mrf.mxu0
        %v619 = vadd.f32 0.0, %v618
        %620 = vmatmul.f32.gmra.mxu0 %v557
        %v621 = vpop.f32.mrf.mxu0
        %v622 = vadd.f32 0.0, %v621
        %623 = vmatmul.f32.gmra.mxu0 %v560
        %v624 = vpop.f32.mrf.mxu0
        %v625 = vadd.f32 0.0, %v624
        %626 = vmatmul.f32.gmra.mxu0 %v563
        %v627 = vpop.f32.mrf.mxu0
        %v628 = vadd.f32 0.0, %v627
        %629 = vmatmul.f32.gmra.mxu0 %v566
        %v630 = vpop.f32.mrf.mxu0
        %v631 = vadd.f32 0.0, %v630
        %632 = vmatmul.f32.gmra.mxu0 %v569
        %v633 = vpop.f32.mrf.mxu0
        %v634 = vadd.f32 0.0, %v633
        %635 = vmatmul.f32.gmra.mxu0 %v572
        %v636 = vpop.f32.mrf.mxu0
        %v637 = vadd.f32 0.0, %v636
        %638 = vmatmul.f32.gmra.mxu0 %v575
        %v639 = vpop.f32.mrf.mxu0
        %v640 = vadd.f32 0.0, %v639
        %641 = vmatmul.f32.gmra.mxu0 %v578
        %v642 = vpop.f32.mrf.mxu0
        %v643 = vadd.f32 0.0, %v642
        %644 = vmatmul.f32.gmra.mxu0 %v581
        %v645 = vpop.f32.mrf.mxu0
        %v646 = vadd.f32 0.0, %v645
        %647 = vmatmul.f32.gmra.mxu0 %v584
        %v648 = vpop.f32.mrf.mxu0
        %v649 = vadd.f32 0.0, %v648
        %650 = vmatmul.f32.gmra.mxu0 %v587
        %v651 = vpop.f32.mrf.mxu0
        %v652 = vadd.f32 0.0, %v651
        %653 = vmatmul.f32.gmra.mxu0 %v590
        %v654 = vpop.f32.mrf.mxu0
        %v655 = vadd.f32 0.0, %v654
        %656 = vmatmul.f32.gmra.mxu0 %v593
        %v657 = vpop.f32.mrf.mxu0
        %v658 = vadd.f32 0.0, %v657
        %659 = vdwg.mxu0
        %v660 = vadd.f32 %v499, %v613
        %v661 = vadd.f32 %v500, %v616
        %v662 = vadd.f32 %v501, %v619
        %v663 = vadd.f32 %v502, %v622
        %v664 = vadd.f32 %v503, %v625
        %v665 = vadd.f32 %v504, %v628
        %v666 = vadd.f32 %v505, %v631
        %v667 = vadd.f32 %v506, %v634
        %v668 = vadd.f32 %v507, %v637
        %v669 = vadd.f32 %v508, %v640
        %v670 = vadd.f32 %v509, %v643
        %v671 = vadd.f32 %v510, %v646
        %v672 = vadd.f32 %v511, %v649
        %v673 = vadd.f32 %v512, %v652
        %v674 = vadd.f32 %v513, %v655
        %v675 = vadd.f32 %v514, %v658
        %676 = vst [vmem:[#allocation7] sm:$0xff] %v660
        %677 = vst [vmem:[#allocation7 + $0x8] sm:$0xff] %v661
        %678 = vst [vmem:[#allocation7 + $0x10] sm:$0xff] %v662
        %679 = vst [vmem:[#allocation7 + $0x18] sm:$0xff] %v663
        %680 = vst [vmem:[#allocation7 + $0x20] sm:$0xff] %v664
        %681 = vst [vmem:[#allocation7 + $0x28] sm:$0xff] %v665
        %682 = vst [vmem:[#allocation7 + $0x30] sm:$0xff] %v666
        %683 = vst [vmem:[#allocation7 + $0x38] sm:$0xff] %v667
        %684 = vst [vmem:[#allocation7 + $0x40] sm:$0xff] %v668
        %685 = vst [vmem:[#allocation7 + $0x48] sm:$0xff] %v669
        %686 = vst [vmem:[#allocation7 + $0x50] sm:$0xff] %v670
        %687 = vst [vmem:[#allocation7 + $0x58] sm:$0xff] %v671
        %688 = vst [vmem:[#allocation7 + $0x60] sm:$0xff] %v672
        %689 = vst [vmem:[#allocation7 + $0x68] sm:$0xff] %v673
        %690 = vst [vmem:[#allocation7 + $0x70] sm:$0xff] %v674
        %691 = vst [vmem:[#allocation7 + $0x78] sm:$0xff] %v675
        %p692 = scmp.eq.s32.totalorder %s20, 3
        // Predicated region
        $region41: #{tpu_custom_call.1} parent=27 // pred_check
          %p693 = pneg %p692
        $region42: #{tpu_custom_call.1} parent=27 // pred_check_branch
          %695 = sbr.rel (%p693) target = $region44
        $region43: #{tpu_custom_call.1} parent=27 // pred_region
          %v696 = vld [vmem:[#allocation2] sm:$0x1]
          %v697 = vld [vmem:[#allocation3] sm:$0x1]
          %v698 = vld [vmem:[#allocation4] sm:$0xff]
          %v699 = vld [vmem:[#allocation4 + $0x8] sm:$0xff]
          %v700 = vld [vmem:[#allocation4 + $0x10] sm:$0xff]
          %v701 = vld [vmem:[#allocation4 + $0x18] sm:$0xff]
          %v702 = vld [vmem:[#allocation4 + $0x20] sm:$0xff]
          %v703 = vld [vmem:[#allocation4 + $0x28] sm:$0xff]
          %v704 = vld [vmem:[#allocation4 + $0x30] sm:$0xff]
          %v705 = vld [vmem:[#allocation4 + $0x38] sm:$0xff]
          %v706 = vld [vmem:[#allocation4 + $0x40] sm:$0xff]
          %v707 = vld [vmem:[#allocation4 + $0x48] sm:$0xff]
          %v708 = vld [vmem:[#allocation4 + $0x50] sm:$0xff]
          %v709 = vld [vmem:[#allocation4 + $0x58] sm:$0xff]
          %v710 = vld [vmem:[#allocation4 + $0x60] sm:$0xff]
          %v711 = vld [vmem:[#allocation4 + $0x68] sm:$0xff]
          %v712 = vld [vmem:[#allocation4 + $0x70] sm:$0xff]
          %v713 = vld [vmem:[#allocation4 + $0x78] sm:$0xff]
          %v714 = vmul.f32 %v696, 0.015625
          %v715 = vmul.f32 %v714, 64.0
          %v716 = vmul.f32 %v715, %v714
          %v717 = vsub.f32 %v697, %v716
          %v718 = vmul.f32 %v717, 0.015873017
          %v719 = vadd.f32 %v718, 0.0001
          %v720 = vrsqrt.pop %v719
          %v721 = vmul.f32 %v720, %v719
          %v722 = vmul.f32 %v721, %v720
          %v723 = vmul.f32 0.5, %v722
          %v724 = vsub.f32 1.5, %v723
          %v725 = vmul.f32 %v720, %v724
          %v726 = vmul.f32 %v719, %v725
          %vm727 = vcmp.eq.f32.partialorder %v719, inf
          %v728 = vsel %vm727, %v719, %v726
          %vm729 = vcmp.eq.f32.partialorder %v719, 0.0
          %v730 = vand.u32 %v719, 2147483648
          %v731 = vsel %vm729, %v730, %v728
          %v732 = vsub.f32 1.0, %v731
          %v733 = vmax.f32 %v732, 0.0
          %vm734 = vcmask 1040384
          %v735 = vsel %vm734, %v733, 0.0
          %736 = vadd.xlane.f32.xlu0 %v735
          %v737 = vpop.xlane.xlu0 %736
          %v738 = vrot.slane %v737, 4
          %v739 = vadd.f32 %v737, %v738
          %v740 = vrot.slane %v739, 2
          %v741 = vadd.f32 %v739, %v740
          %v742 = vrot.slane %v741, 1
          %v743 = vadd.f32 %v741, %v742
          %s744 = vtos %v743
          %v745 = vstv %s744
          %v746 = vmul.f32 %v745, 0.0078125
          %v748 = vperm.slane %v714, 0
          %750 = vxpose.xlu0.b32.start [1/16] %v748, 128
          %751 = vxpose.xlu0.b32.cont [2/16] %v748, 128
          %752 = vxpose.xlu0.b32.cont [3/16] %v748, 128
          %753 = vxpose.xlu0.b32.cont [4/16] %v748, 128
          %754 = vxpose.xlu0.b32.cont [5/16] %v748, 128
          %755 = vxpose.xlu0.b32.cont [6/16] %v748, 128
          %756 = vxpose.xlu0.b32.cont [7/16] %v748, 128
          %757 = vxpose.xlu0.b32.cont [8/16] %v748, 128
          %758 = vxpose.xlu0.b32.cont [9/16] %v748, 128
          %759 = vxpose.xlu0.b32.cont [10/16] %v748, 128
          %760 = vxpose.xlu0.b32.cont [11/16] %v748, 128
          %761 = vxpose.xlu0.b32.cont [12/16] %v748, 128
          %762 = vxpose.xlu0.b32.cont [13/16] %v748, 128
          %763 = vxpose.xlu0.b32.cont [14/16] %v748, 128
          %764 = vxpose.xlu0.b32.cont [15/16] %v748, 128
          %765 = vxpose.xlu0.b32.end [16/16] %v748, 128
          %v766 = vpop.trf.xlu0
          %v767 = vpop.trf.xlu0
          %v768 = vpop.trf.xlu0
          %v769 = vpop.trf.xlu0
          %v770 = vpop.trf.xlu0
          %v771 = vpop.trf.xlu0
          %v772 = vpop.trf.xlu0
          %v773 = vpop.trf.xlu0
          %v774 = vpop.trf.xlu0
          %v775 = vpop.trf.xlu0
          %v776 = vpop.trf.xlu0
          %v777 = vpop.trf.xlu0
          %v778 = vpop.trf.xlu0
          %v779 = vpop.trf.xlu0
          %v780 = vpop.trf.xlu0
          %v781 = vpop.trf.xlu0
          %v782 = vmul.f32 %v766, %v748
          %v783 = vmul.f32 %v767, %v748
          %v784 = vmul.f32 %v768, %v748
          %v785 = vmul.f32 %v769, %v748
          %v786 = vmul.f32 %v770, %v748
          %v787 = vmul.f32 %v771, %v748
          %v788 = vmul.f32 %v772, %v748
          %v789 = vmul.f32 %v773, %v748
          %v790 = vmul.f32 %v774, %v748
          %v791 = vmul.f32 %v775, %v748
          %v792 = vmul.f32 %v776, %v748
          %v793 = vmul.f32 %v777, %v748
          %v794 = vmul.f32 %v778, %v748
          %v795 = vmul.f32 %v779, %v748
          %v796 = vmul.f32 %v780, %v748
          %v797 = vmul.f32 %v781, %v748
          %v798 = vmul.f32 %v782, 64.0
          %v799 = vmul.f32 %v783, 64.0
          %v800 = vmul.f32 %v784, 64.0
          %v801 = vmul.f32 %v785, 64.0
          %v802 = vmul.f32 %v786, 64.0
          %v803 = vmul.f32 %v787, 64.0
          %v804 = vmul.f32 %v788, 64.0
          %v805 = vmul.f32 %v789, 64.0
          %v806 = vmul.f32 %v790, 64.0
          %v807 = vmul.f32 %v791, 64.0
          %v808 = vmul.f32 %v792, 64.0
          %v809 = vmul.f32 %v793, 64.0
          %v810 = vmul.f32 %v794, 64.0
          %v811 = vmul.f32 %v795, 64.0
          %v812 = vmul.f32 %v796, 64.0
          %v813 = vmul.f32 %v797, 64.0
          %v814 = vsub.f32 %v698, %v798
          %v815 = vsub.f32 %v699, %v799
          %v816 = vsub.f32 %v700, %v800
          %v817 = vsub.f32 %v701, %v801
          %v818 = vsub.f32 %v702, %v802
          %v819 = vsub.f32 %v703, %v803
          %v820 = vsub.f32 %v704, %v804
          %v821 = vsub.f32 %v705, %v805
          %v822 = vsub.f32 %v706, %v806
          %v823 = vsub.f32 %v707, %v807
          %v824 = vsub.f32 %v708, %v808
          %v825 = vsub.f32 %v709, %v809
          %v826 = vsub.f32 %v710, %v810
          %v827 = vsub.f32 %v711, %v811
          %v828 = vsub.f32 %v712, %v812
          %v829 = vsub.f32 %v713, %v813
          %v830 = vmul.f32 %v814, %v814
          %v831 = vmul.f32 %v815, %v815
          %v832 = vmul.f32 %v816, %v816
          %v833 = vmul.f32 %v817, %v817
          %v834 = vmul.f32 %v818, %v818
          %v835 = vmul.f32 %v819, %v819
          %v836 = vmul.f32 %v820, %v820
          %v837 = vmul.f32 %v821, %v821
          %v838 = vmul.f32 %v822, %v822
          %v839 = vmul.f32 %v823, %v823
          %v840 = vmul.f32 %v824, %v824
          %v841 = vmul.f32 %v825, %v825
          %v842 = vmul.f32 %v826, %v826
          %v843 = vmul.f32 %v827, %v827
          %v844 = vmul.f32 %v828, %v828
          %v845 = vmul.f32 %v829, %v829
          %v846 = vadd.f32 %v830, %v831
          %v847 = vadd.f32 %v846, %v832
          %v848 = vadd.f32 %v847, %v833
          %v849 = vadd.f32 %v848, %v834
          %v850 = vadd.f32 %v849, %v835
          %v851 = vadd.f32 %v850, %v836
          %v852 = vadd.f32 %v851, %v837
          %v853 = vadd.f32 %v852, %v838
          %v854 = vadd.f32 %v853, %v839
          %v855 = vadd.f32 %v854, %v840
          %v856 = vadd.f32 %v855, %v841
          %v857 = vadd.f32 %v856, %v842
          %v858 = vadd.f32 %v857, %v843
          %v859 = vadd.f32 %v858, %v844
          %v860 = vadd.f32 %v859, %v845
          %861 = vadd.xlane.f32.xlu0 %v860
          %v862 = vpop.xlane.xlu0 %861
          %v863 = vrot.slane %v862, 4
          %v864 = vadd.f32 %v862, %v863
          %v865 = vrot.slane %v864, 2
          %v866 = vadd.f32 %v864, %v865
          %v867 = vrot.slane %v866, 1
          %v868 = vadd.f32 %v866, %v867
          %s869 = vtos %v868
          %v870 = vstv %s869
          %v871 = vmul.f32 %v870, 0.00025195265
          %v872 = vmul.f32 %v718, %v718
          %v873 = vsel %vm734, %v872, 0.0
          %874 = vadd.xlane.f32.xlu0 %v873
          %v875 = vpop.xlane.xlu0 %874
          %v876 = vrot.slane %v875, 4
          %v877 = vadd.f32 %v875, %v876
          %v878 = vrot.slane %v877, 2
          %v879 = vadd.f32 %v877, %v878
          %v880 = vrot.slane %v879, 1
          %v881 = vadd.f32 %v879, %v880
          %s882 = vtos %v881
          %v883 = vstv %s882
          %v884 = vsub.f32 %v871, %v883
          %v885 = vmul.f32 %v884, 0.0078125
          %v886 = vld [vmem:[#allocation5] sm:$0x1]
          %v887 = vld [vmem:[#allocation6] sm:$0x1]
          %v888 = vld [vmem:[#allocation7] sm:$0xff]
          %v889 = vld [vmem:[#allocation7 + $0x8] sm:$0xff]
          %v890 = vld [vmem:[#allocation7 + $0x10] sm:$0xff]
          %v891 = vld [vmem:[#allocation7 + $0x18] sm:$0xff]
          %v892 = vld [vmem:[#allocation7 + $0x20] sm:$0xff]
          %v893 = vld [vmem:[#allocation7 + $0x28] sm:$0xff]
          %v894 = vld [vmem:[#allocation7 + $0x30] sm:$0xff]
          %v895 = vld [vmem:[#allocation7 + $0x38] sm:$0xff]
          %v896 = vld [vmem:[#allocation7 + $0x40] sm:$0xff]
          %v897 = vld [vmem:[#allocation7 + $0x48] sm:$0xff]
          %v898 = vld [vmem:[#allocation7 + $0x50] sm:$0xff]
          %v899 = vld [vmem:[#allocation7 + $0x58] sm:$0xff]
          %v900 = vld [vmem:[#allocation7 + $0x60] sm:$0xff]
          %v901 = vld [vmem:[#allocation7 + $0x68] sm:$0xff]
          %v902 = vld [vmem:[#allocation7 + $0x70] sm:$0xff]
          %v903 = vld [vmem:[#allocation7 + $0x78] sm:$0xff]
          %v904 = vmul.f32 %v886, 0.015625
          %v905 = vmul.f32 %v904, 64.0
          %v906 = vmul.f32 %v905, %v904
          %v907 = vsub.f32 %v887, %v906
          %v908 = vmul.f32 %v907, 0.015873017
          %v909 = vadd.f32 %v908, 0.0001
          %v910 = vrsqrt.pop %v909
          %v911 = vmul.f32 %v910, %v909
          %v912 = vmul.f32 %v911, %v910
          %v913 = vmul.f32 0.5, %v912
          %v914 = vsub.f32 1.5, %v913
          %v915 = vmul.f32 %v910, %v914
          %v916 = vmul.f32 %v909, %v915
          %vm917 = vcmp.eq.f32.partialorder %v909, inf
          %v918 = vsel %vm917, %v909, %v916
          %vm919 = vcmp.eq.f32.partialorder %v909, 0.0
          %v920 = vand.u32 %v909, 2147483648
          %v921 = vsel %vm919, %v920, %v918
          %v922 = vsub.f32 1.0, %v921
          %v923 = vmax.f32 %v922, 0.0
          %v924 = vsel %vm734, %v923, 0.0
          %925 = vadd.xlane.f32.xlu0 %v924
          %v926 = vpop.xlane.xlu0 %925
          %v927 = vrot.slane %v926, 4
          %v928 = vadd.f32 %v926, %v927
          %v929 = vrot.slane %v928, 2
          %v930 = vadd.f32 %v928, %v929
          %v931 = vrot.slane %v930, 1
          %v932 = vadd.f32 %v930, %v931
          %s933 = vtos %v932
          %v934 = vstv %s933
          %v935 = vmul.f32 %v934, 0.0078125
          %v937 = vperm.slane %v904, 0
          %939 = vxpose.xlu0.b32.start [1/16] %v937, 128
          %940 = vxpose.xlu0.b32.cont [2/16] %v937, 128
          %941 = vxpose.xlu0.b32.cont [3/16] %v937, 128
          %942 = vxpose.xlu0.b32.cont [4/16] %v937, 128
          %943 = vxpose.xlu0.b32.cont [5/16] %v937, 128
          %944 = vxpose.xlu0.b32.cont [6/16] %v937, 128
          %945 = vxpose.xlu0.b32.cont [7/16] %v937, 128
          %946 = vxpose.xlu0.b32.cont [8/16] %v937, 128
          %947 = vxpose.xlu0.b32.cont [9/16] %v937, 128
          %948 = vxpose.xlu0.b32.cont [10/16] %v937, 128
          %949 = vxpose.xlu0.b32.cont [11/16] %v937, 128
          %950 = vxpose.xlu0.b32.cont [12/16] %v937, 128
          %951 = vxpose.xlu0.b32.cont [13/16] %v937, 128
          %952 = vxpose.xlu0.b32.cont [14/16] %v937, 128
          %953 = vxpose.xlu0.b32.cont [15/16] %v937, 128
          %954 = vxpose.xlu0.b32.end [16/16] %v937, 128
          %v955 = vpop.trf.xlu0
          %v956 = vpop.trf.xlu0
          %v957 = vpop.trf.xlu0
          %v958 = vpop.trf.xlu0
          %v959 = vpop.trf.xlu0
          %v960 = vpop.trf.xlu0
          %v961 = vpop.trf.xlu0
          %v962 = vpop.trf.xlu0
          %v963 = vpop.trf.xlu0
          %v964 = vpop.trf.xlu0
          %v965 = vpop.trf.xlu0
          %v966 = vpop.trf.xlu0
          %v967 = vpop.trf.xlu0
          %v968 = vpop.trf.xlu0
          %v969 = vpop.trf.xlu0
          %v970 = vpop.trf.xlu0
          %v971 = vmul.f32 %v955, %v937
          %v972 = vmul.f32 %v956, %v937
          %v973 = vmul.f32 %v957, %v937
          %v974 = vmul.f32 %v958, %v937
          %v975 = vmul.f32 %v959, %v937
          %v976 = vmul.f32 %v960, %v937
          %v977 = vmul.f32 %v961, %v937
          %v978 = vmul.f32 %v962, %v937
          %v979 = vmul.f32 %v963, %v937
          %v980 = vmul.f32 %v964, %v937
          %v981 = vmul.f32 %v965, %v937
          %v982 = vmul.f32 %v966, %v937
          %v983 = vmul.f32 %v967, %v937
          %v984 = vmul.f32 %v968, %v937
          %v985 = vmul.f32 %v969, %v937
          %v986 = vmul.f32 %v970, %v937
          %v987 = vmul.f32 %v971, 64.0
          %v988 = vmul.f32 %v972, 64.0
          %v989 = vmul.f32 %v973, 64.0
          %v990 = vmul.f32 %v974, 64.0
          %v991 = vmul.f32 %v975, 64.0
          %v992 = vmul.f32 %v976, 64.0
          %v993 = vmul.f32 %v977, 64.0
          %v994 = vmul.f32 %v978, 64.0
          %v995 = vmul.f32 %v979, 64.0
          %v996 = vmul.f32 %v980, 64.0
          %v997 = vmul.f32 %v981, 64.0
          %v998 = vmul.f32 %v982, 64.0
          %v999 = vmul.f32 %v983, 64.0
          %v1000 = vmul.f32 %v984, 64.0
          %v1001 = vmul.f32 %v985, 64.0
          %v1002 = vmul.f32 %v986, 64.0
          %v1003 = vsub.f32 %v888, %v987
          %v1004 = vsub.f32 %v889, %v988
          %v1005 = vsub.f32 %v890, %v989
          %v1006 = vsub.f32 %v891, %v990
          %v1007 = vsub.f32 %v892, %v991
          %v1008 = vsub.f32 %v893, %v992
          %v1009 = vsub.f32 %v894, %v993
          %v1010 = vsub.f32 %v895, %v994
          %v1011 = vsub.f32 %v896, %v995
          %v1012 = vsub.f32 %v897, %v996
          %v1013 = vsub.f32 %v898, %v997
          %v1014 = vsub.f32 %v899, %v998
          %v1015 = vsub.f32 %v900, %v999
          %v1016 = vsub.f32 %v901, %v1000
          %v1017 = vsub.f32 %v902, %v1001
          %v1018 = vsub.f32 %v903, %v1002
          %v1019 = vmul.f32 %v1003, %v1003
          %v1020 = vmul.f32 %v1004, %v1004
          %v1021 = vmul.f32 %v1005, %v1005
          %v1022 = vmul.f32 %v1006, %v1006
          %v1023 = vmul.f32 %v1007, %v1007
          %v1024 = vmul.f32 %v1008, %v1008
          %v1025 = vmul.f32 %v1009, %v1009
          %v1026 = vmul.f32 %v1010, %v1010
          %v1027 = vmul.f32 %v1011, %v1011
          %v1028 = vmul.f32 %v1012, %v1012
          %v1029 = vmul.f32 %v1013, %v1013
          %v1030 = vmul.f32 %v1014, %v1014
          %v1031 = vmul.f32 %v1015, %v1015
          %v1032 = vmul.f32 %v1016, %v1016
          %v1033 = vmul.f32 %v1017, %v1017
          %v1034 = vmul.f32 %v1018, %v1018
          %v1035 = vadd.f32 %v1019, %v1020
          %v1036 = vadd.f32 %v1035, %v1021
          %v1037 = vadd.f32 %v1036, %v1022
          %v1038 = vadd.f32 %v1037, %v1023
          %v1039 = vadd.f32 %v1038, %v1024
          %v1040 = vadd.f32 %v1039, %v1025
          %v1041 = vadd.f32 %v1040, %v1026
          %v1042 = vadd.f32 %v1041, %v1027
          %v1043 = vadd.f32 %v1042, %v1028
          %v1044 = vadd.f32 %v1043, %v1029
          %v1045 = vadd.f32 %v1044, %v1030
          %v1046 = vadd.f32 %v1045, %v1031
          %v1047 = vadd.f32 %v1046, %v1032
          %v1048 = vadd.f32 %v1047, %v1033
          %v1049 = vadd.f32 %v1048, %v1034
          %1050 = vadd.xlane.f32.xlu0 %v1049
          %v1051 = vpop.xlane.xlu0 %1050
          %v1052 = vrot.slane %v1051, 4
          %v1053 = vadd.f32 %v1051, %v1052
          %v1054 = vrot.slane %v1053, 2
          %v1055 = vadd.f32 %v1053, %v1054
          %v1056 = vrot.slane %v1055, 1
          %v1057 = vadd.f32 %v1055, %v1056
          %s1058 = vtos %v1057
          %v1059 = vstv %s1058
          %v1060 = vmul.f32 %v1059, 0.00025195265
          %v1061 = vmul.f32 %v908, %v908
          %v1062 = vsel %vm734, %v1061, 0.0
          %1063 = vadd.xlane.f32.xlu0 %v1062
          %v1064 = vpop.xlane.xlu0 %1063
          %v1065 = vrot.slane %v1064, 4
          %v1066 = vadd.f32 %v1064, %v1065
          %v1067 = vrot.slane %v1066, 2
          %v1068 = vadd.f32 %v1066, %v1067
          %v1069 = vrot.slane %v1068, 1
          %v1070 = vadd.f32 %v1068, %v1069
          %s1071 = vtos %v1070
          %v1072 = vstv %s1071
          %v1073 = vsub.f32 %v1060, %v1072
          %v1074 = vmul.f32 %v1073, 0.0078125
          %v1075 = vld [vmem:[#allocation8] sm:$0x1]
          %v1076 = vmul.f32 %v1075, 0.00012207031
          %v1077 = vmul.f32 %v1076, 25.0
          %v1078 = vadd.f32 %v746, %v935
          %v1079 = vmul.f32 %v1078, 25.0
          %v1080 = vadd.f32 %v1077, %v1079
          %v1081 = vadd.f32 %v885, %v1074
          %v1082 = vadd.f32 %v1080, %v1081
          %1083 = vst.msk [vmem:[#allocation14] sm:$0x1] %vm259, %v1082
        $region44: #{tpu_custom_call.1} parent=27 // pred_fallthru
          _
        // Predicated region
        $region45: #{tpu_custom_call.1} parent=27 // pred_check
          %p1084 = pneg %p85
        $region46: #{tpu_custom_call.1} parent=27 // pred_check_branch
          %1086 = sbr.rel (%p1084) target = $region48
        $region47: #{tpu_custom_call.1} parent=27 // pred_region
          %1088 = vsyncadd [#allocation11], 0
          %s1090 = sshll.u32 [#allocation14], 4
          %s1091 = int_to_ptr.vmem [resolvable:$true] %s1090
          %s1092 = sshll.u32 %s2, 4
          %s1093 = int_to_ptr.hbm [resolvable:$true] %s1092
          %1095 = dma.vmem_to_hbm [thread:$0]  %s1091, 16, %s1093, [#allocation11]
        $region48: #{tpu_custom_call.1} parent=27 // pred_fallthru
          _
        // Predicated region
        $region49: #{tpu_custom_call.1} parent=27 // pred_check
          %p1096 = pneg %p85
        $region50: #{tpu_custom_call.1} parent=27 // pred_check_branch
          %1098 = sbr.rel (%p1096) target = $region52
        $region51: #{tpu_custom_call.1} parent=27 // pred_region
          %1100 = dma.done [#allocation11], 16
        $region52: #{tpu_custom_call.1} parent=27 // pred_fallthru
          _
      $region28: #{tpu_custom_call.1} parent=5 // pred_fallthru
        _
      %p1101 = scmp.le.s32.totalorder 2, %s15
      // Predicated region
      $region53: #{tpu_custom_call.1} parent=5 // pred_check
        %p1102 = pneg %p1101
      $region54: #{tpu_custom_call.1} parent=5 // pred_check_branch
        %1104 = sbr.rel (%p1102) target = $region56
      $region55: #{tpu_custom_call.1} parent=5 // pred_region
        %s1105 = ssub.s32 %s15, 2
      $region56: #{tpu_custom_call.1} parent=5 // pred_fallthru
        _
    $region6: #{tpu_custom_call.1} parent=1 // loop_footer
      %s19 = sadd.s32 1, %s15
    $region7: #{tpu_custom_call.1} parent=1 // loop_footer_branch
      %14 = sbr.rel target = $region3
    $region8: #{tpu_custom_call.1} parent=1 // loop_exit
      _
    %1106 = vsyncpa [#allocation10], 1
    %s1107 = scalar_lea.sflag [#allocation10], 1
    %1108 = vsyncpa %s1107, 1
    %1109 = vsyncpa [#allocation13], 1
    %s1110 = scalar_lea.sflag [#allocation13], 1
    %1111 = vsyncpa %s1110, 1
    %1112 = vsyncpa [#allocation11], 1
    %s1113 = scalar_lea.sflag [#allocation11], 1
    %1114 = vsyncpa %s1113, 1

</llo_original>
